<compile_context>
chip_gen: v7x
topology: tpu7x:2x2x1
jax: 0.10.0
libtpu: 0.0.40
codegen_flags: <defaults>
</compile_context>

<pallas_src>
import functools
import math

import jax
import jax.numpy as jnp
from jax.experimental import pallas as pl
from jax.experimental.pallas import tpu as pltpu

# ---------------- small synthetic BERT config ----------------
VOCAB = 128
HIDDEN = 64
N_HEADS = 2
HEAD_DIM = HIDDEN // N_HEADS
N_LAYERS = 2
INTERMEDIATE = 128
MAX_POS = 32
NUM_LABELS = 3
LOGITS_PAD = 128            # lane-dense padded logits width (sliced in wrapper)
LN_EPS = 1e-12


# ---------------- fused encoder + head kernel ----------------
def _layernorm(v, g, b, eps):
    mean = jnp.mean(v, axis=-1, keepdims=True)
    var = jnp.mean((v - mean) ** 2, axis=-1, keepdims=True)
    return (v - mean) * jax.lax.rsqrt(var + eps) * g + b


def _encoder_kernel(emb_ref, mask_ref,
                    wqkv_ref, bqkv_ref, wo_ref, bo_ref, ln1g_ref, ln1b_ref,
                    wi_ref, bi_ref, wf_ref, bf_ref, ln2g_ref, ln2b_ref,
                    embg_ref, embb_ref, prew_ref, preb_ref, clsw_ref, clsb_ref,
                    out_ref, x_sc,
                    *, batch, seq, n_heads, head_dim, eps):
    layer = pl.program_id(0)
    hidden = n_heads * head_dim

    # ---- grid step 0: embedding LayerNorm -> VMEM-resident activations ----
    @pl.when(layer == 0)
    def _():
        x_sc[...] = _layernorm(emb_ref[...], embg_ref[...], embb_ref[...], eps)
        out_ref[...] = jnp.zeros_like(out_ref)

    x = x_sc[...]                                    # (B*S, H) f32, stays in VMEM

    # ---- fused QKV projection (bf16 MXU inputs, f32 accumulation).
    #      1/sqrt(head_dim) is already folded into the Q weights/bias. ----
    qkv = jnp.dot(x.astype(jnp.bfloat16), wqkv_ref[0],
                  preferred_element_type=jnp.float32) + bqkv_ref[0]   # (B*S, 3H)

    # ---- multi-head self-attention over the WHOLE batch at once per head.
    #      mask_ref is an additive (B*S, B*S) block-diagonal + padding mask,
    #      so cross-batch scores are -1e9 and softmax stays per-sequence. ----
    mask_full = mask_ref[...]                        # (B*S, B*S)
    head_out = []
    for h in range(n_heads):
        c = h * head_dim
        qh = qkv[:, c:c + head_dim].astype(jnp.bfloat16)
        kh = qkv[:, hidden + c:hidden + c + head_dim].astype(jnp.bfloat16)
        vh = qkv[:, 2 * hidden + c:2 * hidden + c + head_dim].astype(jnp.bfloat16)
        s = jax.lax.dot_general(qh, kh, (((1,), (1,)), ((), ())),
                                preferred_element_type=jnp.float32)   # (B*S, B*S)
        s = s + mask_full
        s = s - jnp.max(s, axis=-1, keepdims=True)
        p = jnp.exp(s)
        p = p * pl.reciprocal(jnp.sum(p, axis=-1, keepdims=True), approx=True)
        head_out.append(jnp.dot(p.astype(jnp.bfloat16), vh,
                                preferred_element_type=jnp.float32))  # (B*S, hd)
    ctx = jnp.concatenate(head_out, axis=-1)                          # (B*S, H)

    attn = jnp.dot(ctx.astype(jnp.bfloat16), wo_ref[0],
                   preferred_element_type=jnp.float32) + bo_ref[0]
    x1 = _layernorm(attn + x, ln1g_ref[0], ln1b_ref[0], eps)

    # ---- feed-forward ----
    inter = jnp.dot(x1.astype(jnp.bfloat16), wi_ref[0],
                    preferred_element_type=jnp.float32) + bi_ref[0]
    # TODO(synk): HF BERT uses exact erf-GELU; tanh approximation used here.
    inter = jax.nn.gelu(inter, approximate=True)
    ffn = jnp.dot(inter.astype(jnp.bfloat16), wf_ref[0],
                  preferred_element_type=jnp.float32) + bf_ref[0]
    x2 = _layernorm(ffn + x1, ln2g_ref[0], ln2b_ref[0], eps)
    x_sc[...] = x2

    # ---- last layer: fused classification head on the CLS token ----
    @pl.when(layer == pl.num_programs(0) - 1)
    def _():
        pooled = jnp.concatenate(
            [x2[b * seq:b * seq + 1, :] for b in range(batch)], axis=0)  # (B, H)
        h1 = jnp.dot(pooled.astype(jnp.bfloat16), prew_ref[...],
                     preferred_element_type=jnp.float32) + preb_ref[...]
        h1 = jnp.maximum(h1, 0.0)        # ReLU; dropout is identity at inference
        out_ref[...] = jnp.dot(h1.astype(jnp.bfloat16), clsw_ref[...],
                               preferred_element_type=jnp.float32) + clsb_ref[...]


# ---------------- parameter init (deterministic) ----------------
def init_params(key):
    def normal(k, shape, scale=0.02):
        return scale * jax.random.normal(k, shape, dtype=jnp.float32)

    keys = jax.random.split(key, 6 + N_LAYERS)
    params = {
        "word_emb": normal(keys[0], (VOCAB, HIDDEN)),
        "pos_emb": normal(keys[1], (MAX_POS, HIDDEN)),
        "type_emb": normal(keys[2], (2, HIDDEN)),
        "emb_ln_g": jnp.ones((HIDDEN,), jnp.float32),
        "emb_ln_b": jnp.zeros((HIDDEN,), jnp.float32),
        "pre_w": normal(keys[3], (HIDDEN, HIDDEN)),
        "pre_b": jnp.zeros((HIDDEN,), jnp.float32),
        "cls_w": normal(keys[4], (HIDDEN, NUM_LABELS)),
        "cls_b": jnp.zeros((NUM_LABELS,), jnp.float32),
        "layers": [],
    }
    for i in range(N_LAYERS):
        lk = jax.random.split(keys[6 + i], 6)
        params["layers"].append({
            "wq": normal(lk[0], (HIDDEN, HIDDEN)),
            "bq": jnp.zeros((HIDDEN,), jnp.float32),
            "wk": normal(lk[1], (HIDDEN, HIDDEN)),
            "bk": jnp.zeros((HIDDEN,), jnp.float32),
            "wv": normal(lk[2], (HIDDEN, HIDDEN)),
            "bv": jnp.zeros((HIDDEN,), jnp.float32),
            "wo": normal(lk[3], (HIDDEN, HIDDEN)),
            "bo": jnp.zeros((HIDDEN,), jnp.float32),
            "ln1_g": jnp.ones((HIDDEN,), jnp.float32),
            "ln1_b": jnp.zeros((HIDDEN,), jnp.float32),
            "wi": normal(lk[4], (HIDDEN, INTERMEDIATE)),
            "bi": jnp.zeros((INTERMEDIATE,), jnp.float32),
            "wf": normal(lk[5], (INTERMEDIATE, HIDDEN)),
            "bf": jnp.zeros((HIDDEN,), jnp.float32),
            "ln2_g": jnp.ones((HIDDEN,), jnp.float32),
            "ln2_b": jnp.zeros((HIDDEN,), jnp.float32),
        })
    return params


def _stack_layer_params(params, scale):
    layers = params["layers"]
    stk = lambda k: jnp.stack([lyr[k] for lyr in layers])          # (L, ...)
    bf16 = jnp.bfloat16
    # Fold the 1/sqrt(head_dim) attention scale into the Q projection.
    wq = stk("wq") * scale
    bq = stk("bq") * scale
    return {
        "wqkv": jnp.concatenate([wq, stk("wk"), stk("wv")],
                                axis=-1).astype(bf16),             # (L, H, 3H)
        "bqkv": jnp.concatenate([bq, stk("bk"), stk("bv")],
                                axis=-1)[:, None, :],              # (L, 1, 3H)
        "wo": stk("wo").astype(bf16),
        "bo": stk("bo")[:, None, :],
        "ln1_g": stk("ln1_g")[:, None, :],
        "ln1_b": stk("ln1_b")[:, None, :],
        "wi": stk("wi").astype(bf16),
        "bi": stk("bi")[:, None, :],
        "wf": stk("wf").astype(bf16),
        "bf": stk("bf")[:, None, :],
        "ln2_g": stk("ln2_g")[:, None, :],
        "ln2_b": stk("ln2_b")[:, None, :],
        "emb_ln_g": params["emb_ln_g"].reshape(1, HIDDEN),
        "emb_ln_b": params["emb_ln_b"].reshape(1, HIDDEN),
        "pre_w": params["pre_w"].astype(bf16),
        "pre_b": params["pre_b"].reshape(1, HIDDEN),
        "cls_w": jnp.zeros((HIDDEN, LOGITS_PAD), jnp.float32)
                   .at[:, :NUM_LABELS].set(params["cls_w"]).astype(bf16),
        "cls_b": jnp.zeros((1, LOGITS_PAD), jnp.float32)
                   .at[0, :NUM_LABELS].set(params["cls_b"]),
    }


# ---------------- forward pass ----------------
def bert_forward(params, input_ids, attention_mask):
    B, S = input_ids.shape
    rows = B * S

    # Embedding gathers are JAX glue; everything downstream is one Pallas kernel.
    # TODO(synk): token_type_ids assumed all-zero (HF default when not passed).
    emb = (params["word_emb"][input_ids]
           + params["pos_emb"][jnp.arange(S)][None, :, :]
           + params["type_emb"][0][None, None, :]).reshape(rows, HIDDEN)

    # Additive (B*S, B*S) mask: block-diagonal batch separation + key padding.
    batch_id = jnp.repeat(jnp.arange(B), S)                          # (B*S,)
    same_batch = batch_id[:, None] == batch_id[None, :]
    key_valid = attention_mask.reshape(-1).astype(bool)              # (B*S,)
    mask_add = jnp.where(same_batch & key_valid[None, :], 0.0, -1e9
                         ).astype(jnp.float32)                       # (B*S, B*S)

    sp = _stack_layer_params(params, 1.0 / math.sqrt(HEAD_DIM))

    per_layer = lambda l: (l, 0, 0)
    const2 = lambda l: (0, 0)

    kernel = functools.partial(
        _encoder_kernel, batch=B, seq=S, n_heads=N_HEADS, head_dim=HEAD_DIM,
        eps=LN_EPS)

    logits_pad = pl.pallas_call(
        kernel,
        out_shape=jax.ShapeDtypeStruct((B, LOGITS_PAD), jnp.float32),
        grid=(N_LAYERS,),
        in_specs=[
            pl.BlockSpec((rows, HIDDEN), const2),                    # emb
            pl.BlockSpec((rows, rows), const2),                      # additive mask
            pl.BlockSpec((1, HIDDEN, 3 * HIDDEN), per_layer),        # wqkv
            pl.BlockSpec((1, 1, 3 * HIDDEN), per_layer),             # bqkv
            pl.BlockSpec((1, HIDDEN, HIDDEN), per_layer),            # wo
            pl.BlockSpec((1, 1, HIDDEN), per_layer),                 # bo
            pl.BlockSpec((1, 1, HIDDEN), per_layer),                 # ln1_g
            pl.BlockSpec((1, 1, HIDDEN), per_layer),                 # ln1_b
            pl.BlockSpec((1, HIDDEN, INTERMEDIATE), per_layer),      # wi
            pl.BlockSpec((1, 1, INTERMEDIATE), per_layer),           # bi
            pl.BlockSpec((1, INTERMEDIATE, HIDDEN), per_layer),      # wf
            pl.BlockSpec((1, 1, HIDDEN), per_layer),                 # bf
            pl.BlockSpec((1, 1, HIDDEN), per_layer),                 # ln2_g
            pl.BlockSpec((1, 1, HIDDEN), per_layer),                 # ln2_b
            pl.BlockSpec((1, HIDDEN), const2),                       # emb_ln_g
            pl.BlockSpec((1, HIDDEN), const2),                       # emb_ln_b
            pl.BlockSpec((HIDDEN, HIDDEN), const2),                  # pre_w
            pl.BlockSpec((1, HIDDEN), const2),                       # pre_b
            pl.BlockSpec((HIDDEN, LOGITS_PAD), const2),              # cls_w (padded)
            pl.BlockSpec((1, LOGITS_PAD), const2),                   # cls_b (padded)
        ],
        out_specs=pl.BlockSpec((B, LOGITS_PAD), const2),
        scratch_shapes=[pltpu.VMEM((rows, HIDDEN), jnp.float32)],
        compiler_params=pltpu.CompilerParams(
            dimension_semantics=("arbitrary",)),
    )(emb, mask_add, sp["wqkv"], sp["bqkv"], sp["wo"], sp["bo"],
      sp["ln1_g"], sp["ln1_b"], sp["wi"], sp["bi"], sp["wf"], sp["bf"],
      sp["ln2_g"], sp["ln2_b"], sp["emb_ln_g"], sp["emb_ln_b"],
      sp["pre_w"], sp["pre_b"], sp["cls_w"], sp["cls_b"])

    # forward() returns (logits,) when labels is None; loss path not implemented.
    return logits_pad[:, :NUM_LABELS]


if __name__ == "__main__":
    key = jax.random.PRNGKey(0)
    pkey, ikey = jax.random.split(key)
    params = init_params(pkey)

    B, S = 2, 8
    input_ids = jax.random.randint(ikey, (B, S), 0, VOCAB, dtype=jnp.int32)
    attention_mask = jnp.ones((B, S), jnp.int32).at[1, 6:].set(0)  # pad last 2 of row 1

    logits = jax.jit(bert_forward)(params, input_ids, attention_mask)
    logits = jax.block_until_ready(logits)
    assert logits.shape == (B, NUM_LABELS) and logits.dtype == jnp.float32
    assert bool(jnp.all(jnp.isfinite(logits)))
    print("KERNEL_OK")
</pallas_src>

<mosaic_0001>
module attributes {stable_mosaic.version = 11 : i64} {
  func.func @_encoder_kernel(%arg0: i32, %arg1: memref<16x64xf32, #tpu.memory_space<vmem>>, %arg2: memref<16x16xf32, #tpu.memory_space<vmem>>, %arg3: memref<1x64x192xbf16, #tpu.memory_space<vmem>>, %arg4: memref<1x1x192xf32, #tpu.memory_space<vmem>>, %arg5: memref<1x64x64xbf16, #tpu.memory_space<vmem>>, %arg6: memref<1x1x64xf32, #tpu.memory_space<vmem>>, %arg7: memref<1x1x64xf32, #tpu.memory_space<vmem>>, %arg8: memref<1x1x64xf32, #tpu.memory_space<vmem>>, %arg9: memref<1x64x128xbf16, #tpu.memory_space<vmem>>, %arg10: memref<1x1x128xf32, #tpu.memory_space<vmem>>, %arg11: memref<1x128x64xbf16, #tpu.memory_space<vmem>>, %arg12: memref<1x1x64xf32, #tpu.memory_space<vmem>>, %arg13: memref<1x1x64xf32, #tpu.memory_space<vmem>>, %arg14: memref<1x1x64xf32, #tpu.memory_space<vmem>>, %arg15: memref<1x64xf32, #tpu.memory_space<vmem>>, %arg16: memref<1x64xf32, #tpu.memory_space<vmem>>, %arg17: memref<64x64xbf16, #tpu.memory_space<vmem>>, %arg18: memref<1x64xf32, #tpu.memory_space<vmem>>, %arg19: memref<64x128xbf16, #tpu.memory_space<vmem>>, %arg20: memref<1x128xf32, #tpu.memory_space<vmem>>, %arg21: memref<2x128xf32, #tpu.memory_space<vmem>>, %arg22: memref<16x64xf32, #tpu.memory_space<vmem>>) attributes {dimension_semantics = [#tpu.dimension_semantics<arbitrary>], iteration_bounds = array<i64: 2>, scalar_prefetch = 0 : i64, scratch_operands = 1 : i64, tpu.core_type = #tpu.core_type<tc>, window_params = [{pipeline_mode = #tpu.pipeline_mode<synchronous>, transform_indices = @transform_0, window_bounds = array<i64: 16, 64>}, {pipeline_mode = #tpu.pipeline_mode<synchronous>, transform_indices = @transform_1, window_bounds = array<i64: 16, 16>}, {transform_indices = @transform_2, window_bounds = array<i64: 1, 64, 192>}, {transform_indices = @transform_3, window_bounds = array<i64: 1, 1, 192>}, {transform_indices = @transform_4, window_bounds = array<i64: 1, 64, 64>}, {transform_indices = @transform_5, window_bounds = array<i64: 1, 1, 64>}, {transform_indices = @transform_6, window_bounds = array<i64: 1, 1, 64>}, {transform_indices = @transform_7, window_bounds = array<i64: 1, 1, 64>}, {transform_indices = @transform_8, window_bounds = array<i64: 1, 64, 128>}, {transform_indices = @transform_9, window_bounds = array<i64: 1, 1, 128>}, {transform_indices = @transform_10, window_bounds = array<i64: 1, 128, 64>}, {transform_indices = @transform_11, window_bounds = array<i64: 1, 1, 64>}, {transform_indices = @transform_12, window_bounds = array<i64: 1, 1, 64>}, {transform_indices = @transform_13, window_bounds = array<i64: 1, 1, 64>}, {pipeline_mode = #tpu.pipeline_mode<synchronous>, transform_indices = @transform_14, window_bounds = array<i64: 1, 64>}, {pipeline_mode = #tpu.pipeline_mode<synchronous>, transform_indices = @transform_15, window_bounds = array<i64: 1, 64>}, {pipeline_mode = #tpu.pipeline_mode<synchronous>, transform_indices = @transform_16, window_bounds = array<i64: 64, 64>}, {pipeline_mode = #tpu.pipeline_mode<synchronous>, transform_indices = @transform_17, window_bounds = array<i64: 1, 64>}, {pipeline_mode = #tpu.pipeline_mode<synchronous>, transform_indices = @transform_18, window_bounds = array<i64: 64, 128>}, {pipeline_mode = #tpu.pipeline_mode<synchronous>, transform_indices = @transform_19, window_bounds = array<i64: 1, 128>}, {pipeline_mode = #tpu.pipeline_mode<synchronous>, transform_indices = @transform_20, window_bounds = array<i64: 2, 128>}]} {
    %c0_i32 = arith.constant 0 : i32
    %0 = arith.cmpi eq, %arg0, %c0_i32 : i32
    %1 = arith.extui %0 : i1 to i32
    %c0_i32_0 = arith.constant 0 : i32
    %2 = arith.cmpi ne, %1, %c0_i32_0 : i32
    scf.if %2 {
      %c0_68 = arith.constant 0 : index
      %c0_69 = arith.constant 0 : index
      %149 = vector.load %arg1[%c0_68, %c0_69] : memref<16x64xf32, #tpu.memory_space<vmem>>, vector<16x64xf32>
      %c0_70 = arith.constant 0 : index
      %c0_71 = arith.constant 0 : index
      %150 = vector.load %arg15[%c0_70, %c0_71] : memref<1x64xf32, #tpu.memory_space<vmem>>, vector<1x64xf32>
      %c0_72 = arith.constant 0 : index
      %c0_73 = arith.constant 0 : index
      %151 = vector.load %arg16[%c0_72, %c0_73] : memref<1x64xf32, #tpu.memory_space<vmem>>, vector<1x64xf32>
      %cst_74 = arith.constant dense<0.000000e+00> : vector<16xf32>
      %152 = vector.multi_reduction <add>, %149, %cst_74 [1] : vector<16x64xf32> to vector<16xf32>
      %153 = vector.shape_cast %152 : vector<16xf32> to vector<16x1xf32>
      %cst_75 = arith.constant 6.400000e+01 : f32
      %154 = vector.broadcast %cst_75 : f32 to vector<16x1xf32>
      %155 = arith.divf %153, %154 : vector<16x1xf32>
      %156 = vector.broadcast %155 : vector<16x1xf32> to vector<16x64xf32>
      %157 = arith.subf %149, %156 : vector<16x64xf32>
      %158 = arith.mulf %157, %157 : vector<16x64xf32>
      %cst_76 = arith.constant dense<0.000000e+00> : vector<16xf32>
      %159 = vector.multi_reduction <add>, %158, %cst_76 [1] : vector<16x64xf32> to vector<16xf32>
      %160 = vector.shape_cast %159 : vector<16xf32> to vector<16x1xf32>
      %cst_77 = arith.constant 6.400000e+01 : f32
      %161 = vector.broadcast %cst_77 : f32 to vector<16x1xf32>
      %162 = arith.divf %160, %161 : vector<16x1xf32>
      %163 = vector.broadcast %155 : vector<16x1xf32> to vector<16x64xf32>
      %164 = arith.subf %149, %163 : vector<16x64xf32>
      %cst_78 = arith.constant 9.99999996E-13 : f32
      %165 = vector.broadcast %cst_78 : f32 to vector<16x1xf32>
      %166 = arith.addf %162, %165 : vector<16x1xf32>
      %167 = math.rsqrt %166 : vector<16x1xf32>
      %168 = vector.broadcast %167 : vector<16x1xf32> to vector<16x64xf32>
      %169 = arith.mulf %164, %168 : vector<16x64xf32>
      %170 = vector.broadcast %150 : vector<1x64xf32> to vector<16x64xf32>
      %171 = arith.mulf %169, %170 : vector<16x64xf32>
      %172 = vector.broadcast %151 : vector<1x64xf32> to vector<16x64xf32>
      %173 = arith.addf %171, %172 : vector<16x64xf32>
      %c0_79 = arith.constant 0 : index
      %c0_80 = arith.constant 0 : index
      %174 = vector.load %arg22[%c0_79, %c0_80] : memref<16x64xf32, #tpu.memory_space<vmem>>, vector<16x64xf32>
      tpu.vector_store %arg22[%c0_79, %c0_80], %173 {strides = array<i32>} : memref<16x64xf32, #tpu.memory_space<vmem>>, vector<16x64xf32>,
      %cst_81 = arith.constant 0.000000e+00 : f32
      %175 = vector.broadcast %cst_81 : f32 to vector<2x128xf32>
      %c0_82 = arith.constant 0 : index
      %c0_83 = arith.constant 0 : index
      %176 = vector.load %arg21[%c0_82, %c0_83] : memref<2x128xf32, #tpu.memory_space<vmem>>, vector<2x128xf32>
      tpu.vector_store %arg21[%c0_82, %c0_83], %175 {strides = array<i32>} : memref<2x128xf32, #tpu.memory_space<vmem>>, vector<2x128xf32>,
    } else {
    }
    %c0 = arith.constant 0 : index
    %c0_1 = arith.constant 0 : index
    %3 = vector.load %arg22[%c0, %c0_1] : memref<16x64xf32, #tpu.memory_space<vmem>>, vector<16x64xf32>
    %4 = arith.truncf %3 : vector<16x64xf32> to vector<16x64xbf16>
    %c0_2 = arith.constant 0 : index
    %c0_3 = arith.constant 0 : index
    %c0_4 = arith.constant 0 : index
    %5 = vector.load %arg3[%c0_2, %c0_3, %c0_4] : memref<1x64x192xbf16, #tpu.memory_space<vmem>>, vector<1x64x192xbf16>
    %6 = vector.shape_cast %5 : vector<1x64x192xbf16> to vector<64x192xbf16>
    %cst = arith.constant dense<0.000000e+00> : vector<16x192xf32>
    %7 = tpu.matmul %4, %6, %cst {dimension_numbers = #tpu.dot_dimension_numbers<[1], [0], [0], [1], [0, 0, 1, 1], [], []>} : vector<16x64xbf16>, vector<64x192xbf16>, vector<16x192xf32> -> vector<16x192xf32>
    %c0_5 = arith.constant 0 : index
    %c0_6 = arith.constant 0 : index
    %c0_7 = arith.constant 0 : index
    %8 = vector.load %arg4[%c0_5, %c0_6, %c0_7] : memref<1x1x192xf32, #tpu.memory_space<vmem>>, vector<1x1x192xf32>
    %9 = vector.shape_cast %8 : vector<1x1x192xf32> to vector<1x192xf32>
    %10 = vector.broadcast %9 : vector<1x192xf32> to vector<16x192xf32>
    %11 = arith.addf %7, %10 : vector<16x192xf32>
    %c0_8 = arith.constant 0 : index
    %c0_9 = arith.constant 0 : index
    %12 = vector.load %arg2[%c0_8, %c0_9] : memref<16x16xf32, #tpu.memory_space<vmem>>, vector<16x16xf32>
    %13 = vector.extract_strided_slice %11 {offsets = [0, 0], sizes = [16, 32], strides = [1, 1]} : vector<16x192xf32> to vector<16x32xf32>
    %14 = arith.truncf %13 : vector<16x32xf32> to vector<16x32xbf16>
    %15 = vector.extract_strided_slice %11 {offsets = [0, 64], sizes = [16, 32], strides = [1, 1]} : vector<16x192xf32> to vector<16x32xf32>
    %16 = arith.truncf %15 : vector<16x32xf32> to vector<16x32xbf16>
    %17 = vector.extract_strided_slice %11 {offsets = [0, 128], sizes = [16, 32], strides = [1, 1]} : vector<16x192xf32> to vector<16x32xf32>
    %18 = arith.truncf %17 : vector<16x32xf32> to vector<16x32xbf16>
    %cst_10 = arith.constant dense<0.000000e+00> : vector<16x16xf32>
    %19 = tpu.matmul %14, %16, %cst_10 {dimension_numbers = #tpu.dot_dimension_numbers<[1], [1], [0], [0], [0, 0, 1, 0], [], []>} : vector<16x32xbf16>, vector<16x32xbf16>, vector<16x16xf32> -> vector<16x16xf32>
    %20 = arith.addf %19, %12 : vector<16x16xf32>
    %cst_11 = arith.constant dense<0xFF800000> : vector<16xf32>
    %21 = vector.multi_reduction <maximumf>, %20, %cst_11 [1] : vector<16x16xf32> to vector<16xf32>
    %22 = vector.shape_cast %21 : vector<16xf32> to vector<16x1xf32>
    %23 = vector.broadcast %22 : vector<16x1xf32> to vector<16x16xf32>
    %24 = arith.subf %20, %23 : vector<16x16xf32>
    %25 = math.exp %24 : vector<16x16xf32>
    %cst_12 = arith.constant dense<0.000000e+00> : vector<16xf32>
    %26 = vector.multi_reduction <add>, %25, %cst_12 [1] : vector<16x16xf32> to vector<16xf32>
    %27 = vector.shape_cast %26 : vector<16xf32> to vector<16x1xf32>
    %28 = tpu.reciprocal %27 {approx = true} : vector<16x1xf32> -> vector<16x1xf32>
    %29 = vector.broadcast %28 : vector<16x1xf32> to vector<16x16xf32>
    %30 = arith.mulf %25, %29 : vector<16x16xf32>
    %31 = arith.truncf %30 : vector<16x16xf32> to vector<16x16xbf16>
    %cst_13 = arith.constant dense<0.000000e+00> : vector<16x32xf32>
    %32 = tpu.matmul %31, %18, %cst_13 {dimension_numbers = #tpu.dot_dimension_numbers<[1], [0], [0], [1], [0, 0, 1, 1], [], []>} : vector<16x16xbf16>, vector<16x32xbf16>, vector<16x32xf32> -> vector<16x32xf32>
    %33 = vector.extract_strided_slice %11 {offsets = [0, 32], sizes = [16, 32], strides = [1, 1]} : vector<16x192xf32> to vector<16x32xf32>
    %34 = arith.truncf %33 : vector<16x32xf32> to vector<16x32xbf16>
    %35 = vector.extract_strided_slice %11 {offsets = [0, 96], sizes = [16, 32], strides = [1, 1]} : vector<16x192xf32> to vector<16x32xf32>
    %36 = arith.truncf %35 : vector<16x32xf32> to vector<16x32xbf16>
    %37 = vector.extract_strided_slice %11 {offsets = [0, 160], sizes = [16, 32], strides = [1, 1]} : vector<16x192xf32> to vector<16x32xf32>
    %38 = arith.truncf %37 : vector<16x32xf32> to vector<16x32xbf16>
    %cst_14 = arith.constant dense<0.000000e+00> : vector<16x16xf32>
    %39 = tpu.matmul %34, %36, %cst_14 {dimension_numbers = #tpu.dot_dimension_numbers<[1], [1], [0], [0], [0, 0, 1, 0], [], []>} : vector<16x32xbf16>, vector<16x32xbf16>, vector<16x16xf32> -> vector<16x16xf32>
    %40 = arith.addf %39, %12 : vector<16x16xf32>
    %cst_15 = arith.constant dense<0xFF800000> : vector<16xf32>
    %41 = vector.multi_reduction <maximumf>, %40, %cst_15 [1] : vector<16x16xf32> to vector<16xf32>
    %42 = vector.shape_cast %41 : vector<16xf32> to vector<16x1xf32>
    %43 = vector.broadcast %42 : vector<16x1xf32> to vector<16x16xf32>
    %44 = arith.subf %40, %43 : vector<16x16xf32>
    %45 = math.exp %44 : vector<16x16xf32>
    %cst_16 = arith.constant dense<0.000000e+00> : vector<16xf32>
    %46 = vector.multi_reduction <add>, %45, %cst_16 [1] : vector<16x16xf32> to vector<16xf32>
    %47 = vector.shape_cast %46 : vector<16xf32> to vector<16x1xf32>
    %48 = tpu.reciprocal %47 {approx = true} : vector<16x1xf32> -> vector<16x1xf32>
    %49 = vector.broadcast %48 : vector<16x1xf32> to vector<16x16xf32>
    %50 = arith.mulf %45, %49 : vector<16x16xf32>
    %51 = arith.truncf %50 : vector<16x16xf32> to vector<16x16xbf16>
    %cst_17 = arith.constant dense<0.000000e+00> : vector<16x32xf32>
    %52 = tpu.matmul %51, %38, %cst_17 {dimension_numbers = #tpu.dot_dimension_numbers<[1], [0], [0], [1], [0, 0, 1, 1], [], []>} : vector<16x16xbf16>, vector<16x32xbf16>, vector<16x32xf32> -> vector<16x32xf32>
    %53 = tpu.concatenate %32, %52 in 1 : vector<16x32xf32>, vector<16x32xf32> -> vector<16x64xf32>
    %54 = arith.truncf %53 : vector<16x64xf32> to vector<16x64xbf16>
    %c0_18 = arith.constant 0 : index
    %c0_19 = arith.constant 0 : index
    %c0_20 = arith.constant 0 : index
    %55 = vector.load %arg5[%c0_18, %c0_19, %c0_20] : memref<1x64x64xbf16, #tpu.memory_space<vmem>>, vector<1x64x64xbf16>
    %56 = vector.shape_cast %55 : vector<1x64x64xbf16> to vector<64x64xbf16>
    %cst_21 = arith.constant dense<0.000000e+00> : vector<16x64xf32>
    %57 = tpu.matmul %54, %56, %cst_21 {dimension_numbers = #tpu.dot_dimension_numbers<[1], [0], [0], [1], [0, 0, 1, 1], [], []>} : vector<16x64xbf16>, vector<64x64xbf16>, vector<16x64xf32> -> vector<16x64xf32>
    %c0_22 = arith.constant 0 : index
    %c0_23 = arith.constant 0 : index
    %c0_24 = arith.constant 0 : index
    %58 = vector.load %arg6[%c0_22, %c0_23, %c0_24] : memref<1x1x64xf32, #tpu.memory_space<vmem>>, vector<1x1x64xf32>
    %59 = vector.shape_cast %58 : vector<1x1x64xf32> to vector<1x64xf32>
    %60 = vector.broadcast %59 : vector<1x64xf32> to vector<16x64xf32>
    %61 = arith.addf %57, %60 : vector<16x64xf32>
    %62 = arith.addf %61, %3 : vector<16x64xf32>
    %c0_25 = arith.constant 0 : index
    %c0_26 = arith.constant 0 : index
    %c0_27 = arith.constant 0 : index
    %63 = vector.load %arg7[%c0_25, %c0_26, %c0_27] : memref<1x1x64xf32, #tpu.memory_space<vmem>>, vector<1x1x64xf32>
    %64 = vector.shape_cast %63 : vector<1x1x64xf32> to vector<1x64xf32>
    %c0_28 = arith.constant 0 : index
    %c0_29 = arith.constant 0 : index
    %c0_30 = arith.constant 0 : index
    %65 = vector.load %arg8[%c0_28, %c0_29, %c0_30] : memref<1x1x64xf32, #tpu.memory_space<vmem>>, vector<1x1x64xf32>
    %66 = vector.shape_cast %65 : vector<1x1x64xf32> to vector<1x64xf32>
    %cst_31 = arith.constant dense<0.000000e+00> : vector<16xf32>
    %67 = vector.multi_reduction <add>, %62, %cst_31 [1] : vector<16x64xf32> to vector<16xf32>
    %68 = vector.shape_cast %67 : vector<16xf32> to vector<16x1xf32>
    %cst_32 = arith.constant 6.400000e+01 : f32
    %69 = vector.broadcast %cst_32 : f32 to vector<16x1xf32>
    %70 = arith.divf %68, %69 : vector<16x1xf32>
    %71 = vector.broadcast %70 : vector<16x1xf32> to vector<16x64xf32>
    %72 = arith.subf %62, %71 : vector<16x64xf32>
    %73 = arith.mulf %72, %72 : vector<16x64xf32>
    %cst_33 = arith.constant dense<0.000000e+00> : vector<16xf32>
    %74 = vector.multi_reduction <add>, %73, %cst_33 [1] : vector<16x64xf32> to vector<16xf32>
    %75 = vector.shape_cast %74 : vector<16xf32> to vector<16x1xf32>
    %cst_34 = arith.constant 6.400000e+01 : f32
    %76 = vector.broadcast %cst_34 : f32 to vector<16x1xf32>
    %77 = arith.divf %75, %76 : vector<16x1xf32>
    %78 = vector.broadcast %70 : vector<16x1xf32> to vector<16x64xf32>
    %79 = arith.subf %62, %78 : vector<16x64xf32>
    %cst_35 = arith.constant 9.99999996E-13 : f32
    %80 = vector.broadcast %cst_35 : f32 to vector<16x1xf32>
    %81 = arith.addf %77, %80 : vector<16x1xf32>
    %82 = math.rsqrt %81 : vector<16x1xf32>
    %83 = vector.broadcast %82 : vector<16x1xf32> to vector<16x64xf32>
    %84 = arith.mulf %79, %83 : vector<16x64xf32>
    %85 = vector.broadcast %64 : vector<1x64xf32> to vector<16x64xf32>
    %86 = arith.mulf %84, %85 : vector<16x64xf32>
    %87 = vector.broadcast %66 : vector<1x64xf32> to vector<16x64xf32>
    %88 = arith.addf %86, %87 : vector<16x64xf32>
    %89 = arith.truncf %88 : vector<16x64xf32> to vector<16x64xbf16>
    %c0_36 = arith.constant 0 : index
    %c0_37 = arith.constant 0 : index
    %c0_38 = arith.constant 0 : index
    %90 = vector.load %arg9[%c0_36, %c0_37, %c0_38] : memref<1x64x128xbf16, #tpu.memory_space<vmem>>, vector<1x64x128xbf16>
    %91 = vector.shape_cast %90 : vector<1x64x128xbf16> to vector<64x128xbf16>
    %cst_39 = arith.constant dense<0.000000e+00> : vector<16x128xf32>
    %92 = tpu.matmul %89, %91, %cst_39 {dimension_numbers = #tpu.dot_dimension_numbers<[1], [0], [0], [1], [0, 0, 1, 1], [], []>} : vector<16x64xbf16>, vector<64x128xbf16>, vector<16x128xf32> -> vector<16x128xf32>
    %c0_40 = arith.constant 0 : index
    %c0_41 = arith.constant 0 : index
    %c0_42 = arith.constant 0 : index
    %93 = vector.load %arg10[%c0_40, %c0_41, %c0_42] : memref<1x1x128xf32, #tpu.memory_space<vmem>>, vector<1x1x128xf32>
    %94 = vector.shape_cast %93 : vector<1x1x128xf32> to vector<1x128xf32>
    %95 = vector.broadcast %94 : vector<1x128xf32> to vector<16x128xf32>
    %96 = arith.addf %92, %95 : vector<16x128xf32>
    %97 = arith.mulf %96, %96 : vector<16x128xf32>
    %98 = arith.mulf %96, %97 : vector<16x128xf32>
    %cst_43 = arith.constant 4.471500e-02 : f32
    %99 = vector.broadcast %cst_43 : f32 to vector<16x128xf32>
    %100 = arith.mulf %99, %98 : vector<16x128xf32>
    %101 = arith.addf %96, %100 : vector<16x128xf32>
    %cst_44 = arith.constant 0.797884583 : f32
    %102 = vector.broadcast %cst_44 : f32 to vector<16x128xf32>
    %103 = arith.mulf %102, %101 : vector<16x128xf32>
    %104 = math.tanh %103 : vector<16x128xf32>
    %cst_45 = arith.constant 1.000000e+00 : f32
    %105 = vector.broadcast %cst_45 : f32 to vector<16x128xf32>
    %106 = arith.addf %105, %104 : vector<16x128xf32>
    %cst_46 = arith.constant 5.000000e-01 : f32
    %107 = vector.broadcast %cst_46 : f32 to vector<16x128xf32>
    %108 = arith.mulf %107, %106 : vector<16x128xf32>
    %109 = arith.mulf %96, %108 : vector<16x128xf32>
    %110 = arith.truncf %109 : vector<16x128xf32> to vector<16x128xbf16>
    %c0_47 = arith.constant 0 : index
    %c0_48 = arith.constant 0 : index
    %c0_49 = arith.constant 0 : index
    %111 = vector.load %arg11[%c0_47, %c0_48, %c0_49] : memref<1x128x64xbf16, #tpu.memory_space<vmem>>, vector<1x128x64xbf16>
    %112 = vector.shape_cast %111 : vector<1x128x64xbf16> to vector<128x64xbf16>
    %cst_50 = arith.constant dense<0.000000e+00> : vector<16x64xf32>
    %113 = tpu.matmul %110, %112, %cst_50 {dimension_numbers = #tpu.dot_dimension_numbers<[1], [0], [0], [1], [0, 0, 1, 1], [], []>} : vector<16x128xbf16>, vector<128x64xbf16>, vector<16x64xf32> -> vector<16x64xf32>
    %c0_51 = arith.constant 0 : index
    %c0_52 = arith.constant 0 : index
    %c0_53 = arith.constant 0 : index
    %114 = vector.load %arg12[%c0_51, %c0_52, %c0_53] : memref<1x1x64xf32, #tpu.memory_space<vmem>>, vector<1x1x64xf32>
    %115 = vector.shape_cast %114 : vector<1x1x64xf32> to vector<1x64xf32>
    %116 = vector.broadcast %115 : vector<1x64xf32> to vector<16x64xf32>
    %117 = arith.addf %113, %116 : vector<16x64xf32>
    %118 = arith.addf %117, %88 : vector<16x64xf32>
    %c0_54 = arith.constant 0 : index
    %c0_55 = arith.constant 0 : index
    %c0_56 = arith.constant 0 : index
    %119 = vector.load %arg13[%c0_54, %c0_55, %c0_56] : memref<1x1x64xf32, #tpu.memory_space<vmem>>, vector<1x1x64xf32>
    %120 = vector.shape_cast %119 : vector<1x1x64xf32> to vector<1x64xf32>
    %c0_57 = arith.constant 0 : index
    %c0_58 = arith.constant 0 : index
    %c0_59 = arith.constant 0 : index
    %121 = vector.load %arg14[%c0_57, %c0_58, %c0_59] : memref<1x1x64xf32, #tpu.memory_space<vmem>>, vector<1x1x64xf32>
    %122 = vector.shape_cast %121 : vector<1x1x64xf32> to vector<1x64xf32>
    %cst_60 = arith.constant dense<0.000000e+00> : vector<16xf32>
    %123 = vector.multi_reduction <add>, %118, %cst_60 [1] : vector<16x64xf32> to vector<16xf32>
    %124 = vector.shape_cast %123 : vector<16xf32> to vector<16x1xf32>
    %cst_61 = arith.constant 6.400000e+01 : f32
    %125 = vector.broadcast %cst_61 : f32 to vector<16x1xf32>
    %126 = arith.divf %124, %125 : vector<16x1xf32>
    %127 = vector.broadcast %126 : vector<16x1xf32> to vector<16x64xf32>
    %128 = arith.subf %118, %127 : vector<16x64xf32>
    %129 = arith.mulf %128, %128 : vector<16x64xf32>
    %cst_62 = arith.constant dense<0.000000e+00> : vector<16xf32>
    %130 = vector.multi_reduction <add>, %129, %cst_62 [1] : vector<16x64xf32> to vector<16xf32>
    %131 = vector.shape_cast %130 : vector<16xf32> to vector<16x1xf32>
    %cst_63 = arith.constant 6.400000e+01 : f32
    %132 = vector.broadcast %cst_63 : f32 to vector<16x1xf32>
    %133 = arith.divf %131, %132 : vector<16x1xf32>
    %134 = vector.broadcast %126 : vector<16x1xf32> to vector<16x64xf32>
    %135 = arith.subf %118, %134 : vector<16x64xf32>
    %cst_64 = arith.constant 9.99999996E-13 : f32
    %136 = vector.broadcast %cst_64 : f32 to vector<16x1xf32>
    %137 = arith.addf %133, %136 : vector<16x1xf32>
    %138 = math.rsqrt %137 : vector<16x1xf32>
    %139 = vector.broadcast %138 : vector<16x1xf32> to vector<16x64xf32>
    %140 = arith.mulf %135, %139 : vector<16x64xf32>
    %141 = vector.broadcast %120 : vector<1x64xf32> to vector<16x64xf32>
    %142 = arith.mulf %140, %141 : vector<16x64xf32>
    %143 = vector.broadcast %122 : vector<1x64xf32> to vector<16x64xf32>
    %144 = arith.addf %142, %143 : vector<16x64xf32>
    %c0_65 = arith.constant 0 : index
    %c0_66 = arith.constant 0 : index
    %145 = vector.load %arg22[%c0_65, %c0_66] : memref<16x64xf32, #tpu.memory_space<vmem>>, vector<16x64xf32>
    tpu.vector_store %arg22[%c0_65, %c0_66], %144 {strides = array<i32>} : memref<16x64xf32, #tpu.memory_space<vmem>>, vector<16x64xf32>,
    %c1_i32 = arith.constant 1 : i32
    %146 = arith.cmpi eq, %arg0, %c1_i32 : i32
    %147 = arith.extui %146 : i1 to i32
    %c0_i32_67 = arith.constant 0 : i32
    %148 = arith.cmpi ne, %147, %c0_i32_67 : i32
    scf.if %148 {
      %149 = vector.extract_strided_slice %144 {offsets = [0, 0], sizes = [1, 64], strides = [1, 1]} : vector<16x64xf32> to vector<1x64xf32>
      %150 = vector.extract_strided_slice %144 {offsets = [8, 0], sizes = [1, 64], strides = [1, 1]} : vector<16x64xf32> to vector<1x64xf32>
      %151 = tpu.concatenate %149, %150 in 0 : vector<1x64xf32>, vector<1x64xf32> -> vector<2x64xf32>
      %152 = arith.truncf %151 : vector<2x64xf32> to vector<2x64xbf16>
      %c0_68 = arith.constant 0 : index
      %c0_69 = arith.constant 0 : index
      %153 = vector.load %arg17[%c0_68, %c0_69] : memref<64x64xbf16, #tpu.memory_space<vmem>>, vector<64x64xbf16>
      %cst_70 = arith.constant dense<0.000000e+00> : vector<2x64xf32>
      %154 = tpu.matmul %152, %153, %cst_70 {dimension_numbers = #tpu.dot_dimension_numbers<[1], [0], [0], [1], [0, 0, 1, 1], [], []>} : vector<2x64xbf16>, vector<64x64xbf16>, vector<2x64xf32> -> vector<2x64xf32>
      %c0_71 = arith.constant 0 : index
      %c0_72 = arith.constant 0 : index
      %155 = vector.load %arg18[%c0_71, %c0_72] : memref<1x64xf32, #tpu.memory_space<vmem>>, vector<1x64xf32>
      %156 = vector.broadcast %155 : vector<1x64xf32> to vector<2x64xf32>
      %157 = arith.addf %154, %156 : vector<2x64xf32>
      %cst_73 = arith.constant 0.000000e+00 : f32
      %158 = vector.broadcast %cst_73 : f32 to vector<2x64xf32>
      %159 = arith.maximumf %157, %158 : vector<2x64xf32>
      %160 = arith.truncf %159 : vector<2x64xf32> to vector<2x64xbf16>
      %c0_74 = arith.constant 0 : index
      %c0_75 = arith.constant 0 : index
      %161 = vector.load %arg19[%c0_74, %c0_75] : memref<64x128xbf16, #tpu.memory_space<vmem>>, vector<64x128xbf16>
      %cst_76 = arith.constant dense<0.000000e+00> : vector<2x128xf32>
      %162 = tpu.matmul %160, %161, %cst_76 {dimension_numbers = #tpu.dot_dimension_numbers<[1], [0], [0], [1], [0, 0, 1, 1], [], []>} : vector<2x64xbf16>, vector<64x128xbf16>, vector<2x128xf32> -> vector<2x128xf32>
      %c0_77 = arith.constant 0 : index
      %c0_78 = arith.constant 0 : index
      %163 = vector.load %arg20[%c0_77, %c0_78] : memref<1x128xf32, #tpu.memory_space<vmem>>, vector<1x128xf32>
      %164 = vector.broadcast %163 : vector<1x128xf32> to vector<2x128xf32>
      %165 = arith.addf %162, %164 : vector<2x128xf32>
      %c0_79 = arith.constant 0 : index
      %c0_80 = arith.constant 0 : index
      %166 = vector.load %arg21[%c0_79, %c0_80] : memref<2x128xf32, #tpu.memory_space<vmem>>, vector<2x128xf32>
      tpu.vector_store %arg21[%c0_79, %c0_80], %165 {strides = array<i32>} : memref<2x128xf32, #tpu.memory_space<vmem>>, vector<2x128xf32>,
    } else {
    }
    return
  }
  func.func @transform_0(%arg0: i32) -> (i32, i32) {
    %c0_i32 = arith.constant 0 : i32
    %c0_i32_0 = arith.constant 0 : i32
    %c0_i32_1 = arith.constant 0 : i32
    return %c0_i32, %c0_i32_0 : i32, i32
  }
  func.func @transform_1(%arg0: i32) -> (i32, i32) {
    %c0_i32 = arith.constant 0 : i32
    %c0_i32_0 = arith.constant 0 : i32
    %c0_i32_1 = arith.constant 0 : i32
    return %c0_i32, %c0_i32_0 : i32, i32
  }
  func.func @transform_2(%arg0: i32) -> (i32, i32, i32) {
    %c0_i32 = arith.constant 0 : i32
    %c0_i32_0 = arith.constant 0 : i32
    %c0_i32_1 = arith.constant 0 : i32
    return %arg0, %c0_i32, %c0_i32_0 : i32, i32, i32
  }
  func.func @transform_3(%arg0: i32) -> (i32, i32, i32) {
    %c0_i32 = arith.constant 0 : i32
    %c0_i32_0 = arith.constant 0 : i32
    %c0_i32_1 = arith.constant 0 : i32
    return %arg0, %c0_i32, %c0_i32_0 : i32, i32, i32
  }
  func.func @transform_4(%arg0: i32) -> (i32, i32, i32) {
    %c0_i32 = arith.constant 0 : i32
    %c0_i32_0 = arith.constant 0 : i32
    %c0_i32_1 = arith.constant 0 : i32
    return %arg0, %c0_i32, %c0_i32_0 : i32, i32, i32
  }
  func.func @transform_5(%arg0: i32) -> (i32, i32, i32) {
    %c0_i32 = arith.constant 0 : i32
    %c0_i32_0 = arith.constant 0 : i32
    %c0_i32_1 = arith.constant 0 : i32
    return %arg0, %c0_i32, %c0_i32_0 : i32, i32, i32
  }
  func.func @transform_6(%arg0: i32) -> (i32, i32, i32) {
    %c0_i32 = arith.constant 0 : i32
    %c0_i32_0 = arith.constant 0 : i32
    %c0_i32_1 = arith.constant 0 : i32
    return %arg0, %c0_i32, %c0_i32_0 : i32, i32, i32
  }
  func.func @transform_7(%arg0: i32) -> (i32, i32, i32) {
    %c0_i32 = arith.constant 0 : i32
    %c0_i32_0 = arith.constant 0 : i32
    %c0_i32_1 = arith.constant 0 : i32
    return %arg0, %c0_i32, %c0_i32_0 : i32, i32, i32
  }
  func.func @transform_8(%arg0: i32) -> (i32, i32, i32) {
    %c0_i32 = arith.constant 0 : i32
    %c0_i32_0 = arith.constant 0 : i32
    %c0_i32_1 = arith.constant 0 : i32
    return %arg0, %c0_i32, %c0_i32_0 : i32, i32, i32
  }
  func.func @transform_9(%arg0: i32) -> (i32, i32, i32) {
    %c0_i32 = arith.constant 0 : i32
    %c0_i32_0 = arith.constant 0 : i32
    %c0_i32_1 = arith.constant 0 : i32
    return %arg0, %c0_i32, %c0_i32_0 : i32, i32, i32
  }
  func.func @transform_10(%arg0: i32) -> (i32, i32, i32) {
    %c0_i32 = arith.constant 0 : i32
    %c0_i32_0 = arith.constant 0 : i32
    %c0_i32_1 = arith.constant 0 : i32
    return %arg0, %c0_i32, %c0_i32_0 : i32, i32, i32
  }
  func.func @transform_11(%arg0: i32) -> (i32, i32, i32) {
    %c0_i32 = arith.constant 0 : i32
    %c0_i32_0 = arith.constant 0 : i32
    %c0_i32_1 = arith.constant 0 : i32
    return %arg0, %c0_i32, %c0_i32_0 : i32, i32, i32
  }
  func.func @transform_12(%arg0: i32) -> (i32, i32, i32) {
    %c0_i32 = arith.constant 0 : i32
    %c0_i32_0 = arith.constant 0 : i32
    %c0_i32_1 = arith.constant 0 : i32
    return %arg0, %c0_i32, %c0_i32_0 : i32, i32, i32
  }
  func.func @transform_13(%arg0: i32) -> (i32, i32, i32) {
    %c0_i32 = arith.constant 0 : i32
    %c0_i32_0 = arith.constant 0 : i32
    %c0_i32_1 = arith.constant 0 : i32
    return %arg0, %c0_i32, %c0_i32_0 : i32, i32, i32
  }
  func.func @transform_14(%arg0: i32) -> (i32, i32) {
    %c0_i32 = arith.constant 0 : i32
    %c0_i32_0 = arith.constant 0 : i32
    %c0_i32_1 = arith.constant 0 : i32
    return %c0_i32, %c0_i32_0 : i32, i32
  }
  func.func @transform_15(%arg0: i32) -> (i32, i32) {
    %c0_i32 = arith.constant 0 : i32
    %c0_i32_0 = arith.constant 0 : i32
    %c0_i32_1 = arith.constant 0 : i32
    return %c0_i32, %c0_i32_0 : i32, i32
  }
  func.func @transform_16(%arg0: i32) -> (i32, i32) {
    %c0_i32 = arith.constant 0 : i32
    %c0_i32_0 = arith.constant 0 : i32
    %c0_i32_1 = arith.constant 0 : i32
    return %c0_i32, %c0_i32_0 : i32, i32
  }
  func.func @transform_17(%arg0: i32) -> (i32, i32) {
    %c0_i32 = arith.constant 0 : i32
    %c0_i32_0 = arith.constant 0 : i32
    %c0_i32_1 = arith.constant 0 : i32
    return %c0_i32, %c0_i32_0 : i32, i32
  }
  func.func @transform_18(%arg0: i32) -> (i32, i32) {
    %c0_i32 = arith.constant 0 : i32
    %c0_i32_0 = arith.constant 0 : i32
    %c0_i32_1 = arith.constant 0 : i32
    return %c0_i32, %c0_i32_0 : i32, i32
  }
  func.func @transform_19(%arg0: i32) -> (i32, i32) {
    %c0_i32 = arith.constant 0 : i32
    %c0_i32_0 = arith.constant 0 : i32
    %c0_i32_1 = arith.constant 0 : i32
    return %c0_i32, %c0_i32_0 : i32, i32
  }
  func.func @transform_20(%arg0: i32) -> (i32, i32) {
    %c0_i32 = arith.constant 0 : i32
    %c0_i32_0 = arith.constant 0 : i32
    %c0_i32_1 = arith.constant 0 : i32
    return %c0_i32, %c0_i32_0 : i32, i32
  }
}

</mosaic_0001>

<llo_original>
// kernel: bert_forward.1
$region0: #{bert_forward.1}
  #allocation0 [shape = 'u32[]', space=smem, size = 0x4, offset = 0x4, fixed_abs, tag = 'smem constant byte address 0x4 - core index']
  #allocation1 [shape = 'u32[144,128]{1,0:T(1,128)}', space=vmem, size = 0x12000, scoped, tag = 'internal scratch']
  #allocation2 [shape = 'f32[16,64]{1,0:T(8,128)}', space=vmem, size = 0x2000, scoped, tag = 'scratch operand']
  %s0 = inlined_call_operand.vmem [shape: f32[16,64], index: 0, kind: input, shape index: {}]
  %s1 = inlined_call_operand.vmem [shape: f32[16,16], index: 1, kind: input, shape index: {}]
  %s2 = inlined_call_operand.vmem [shape: bf16[2,64,192], index: 2, kind: input, shape index: {}]
  %s3 = inlined_call_operand.vmem [shape: f32[2,1,192], index: 3, kind: input, shape index: {}]
  %s4 = inlined_call_operand.vmem [shape: bf16[2,64,64], index: 4, kind: input, shape index: {}]
  %s5 = inlined_call_operand.vmem [shape: f32[2,1,64], index: 5, kind: input, shape index: {}]
  %s6 = inlined_call_operand.vmem [shape: f32[2,1,64], index: 6, kind: input, shape index: {}]
  %s7 = inlined_call_operand.vmem [shape: f32[2,1,64], index: 7, kind: input, shape index: {}]
  %s8 = inlined_call_operand.vmem [shape: bf16[2,64,128], index: 8, kind: input, shape index: {}]
  %s9 = inlined_call_operand.vmem [shape: f32[2,1,128], index: 9, kind: input, shape index: {}]
  %s10 = inlined_call_operand.vmem [shape: bf16[2,128,64], index: 10, kind: input, shape index: {}]
  %s11 = inlined_call_operand.vmem [shape: f32[2,1,64], index: 11, kind: input, shape index: {}]
  %s12 = inlined_call_operand.vmem [shape: f32[2,1,64], index: 12, kind: input, shape index: {}]
  %s13 = inlined_call_operand.vmem [shape: f32[2,1,64], index: 13, kind: input, shape index: {}]
  %s14 = inlined_call_operand.vmem [shape: f32[1,64], index: 14, kind: input, shape index: {}]
  %s15 = inlined_call_operand.vmem [shape: f32[1,64], index: 15, kind: input, shape index: {}]
  %s16 = inlined_call_operand.vmem [shape: bf16[64,64], index: 16, kind: input, shape index: {}]
  %s17 = inlined_call_operand.vmem [shape: f32[1,64], index: 17, kind: input, shape index: {}]
  %s18 = inlined_call_operand.vmem [shape: bf16[64,128], index: 18, kind: input, shape index: {}]
  %s19 = inlined_call_operand.vmem [shape: f32[1,128], index: 19, kind: input, shape index: {}]
  %s20 = inlined_call_operand.hbm [shape: f32[2,128], index: 20, kind: output, shape index: {}]
  %s21 = sld [smem:[#allocation0]]
  $region121: #{bert_forward.1} parent=0
    _
  %s23 = ssub.s32 1, %s21
  %s24 = scalar_select 0, %s23, %s21
  $region1: #{bert_forward.1} parent=0
    #allocation3 [shape = 'u8[1024]{0}', space=vmem, size = 0x400, scoped, tag = 'output window, operand 0, single buffered']
    #allocation4 [shape = 's32[2]{0}', space=sflag, size = 0x8, scoped, tag = 'scoped memory for bert_forward.1']
    %25 = vsyncpa [#allocation4], 0
    loop: start=0, step=1, limit=4
    $region2: #{bert_forward.1} parent=1 // loop_pre_header
      _
    $region3: #{bert_forward.1} parent=1 // loop_header
      %s27 = sphi 0, %s31
      %p28 = scmp.ge.s32.totalorder %s27, 4
      %s35 = sphi 0, %s35
      %s37 = sphi 0, %s35
      %s38 = sphi 0, %s37
      %s52 = sphi 0, %s38
      %s56 = sphi 0, %s56
      %s58 = sphi 0, %s56
      %s59 = sphi 0, %s58
      %s73 = sphi 0, %s59
      %s79 = sphi 0, %s81
      %s82 = sphi 0, %s79
      %s83 = sphi 0, %s82
      %s99 = sphi 0, %s83
      %s105 = sphi 0, %s107
      %s108 = sphi 0, %s105
      %s109 = sphi 0, %s108
      %s125 = sphi 0, %s109
      %s131 = sphi 0, %s133
      %s134 = sphi 0, %s131
      %s135 = sphi 0, %s134
      %s151 = sphi 0, %s135
      %s157 = sphi 0, %s159
      %s160 = sphi 0, %s157
      %s161 = sphi 0, %s160
      %s177 = sphi 0, %s161
      %s183 = sphi 0, %s185
      %s186 = sphi 0, %s183
      %s187 = sphi 0, %s186
      %s203 = sphi 0, %s187
      %s209 = sphi 0, %s211
      %s212 = sphi 0, %s209
      %s213 = sphi 0, %s212
      %s229 = sphi 0, %s213
      %s235 = sphi 0, %s237
      %s238 = sphi 0, %s235
      %s239 = sphi 0, %s238
      %s255 = sphi 0, %s239
      %s261 = sphi 0, %s263
      %s264 = sphi 0, %s261
      %s265 = sphi 0, %s264
      %s281 = sphi 0, %s265
      %s287 = sphi 0, %s289
      %s290 = sphi 0, %s287
      %s291 = sphi 0, %s290
      %s307 = sphi 0, %s291
      %s313 = sphi 0, %s315
      %s316 = sphi 0, %s313
      %s317 = sphi 0, %s316
      %s333 = sphi 0, %s317
      %s339 = sphi 0, %s341
      %s342 = sphi 0, %s339
      %s343 = sphi 0, %s342
      %s359 = sphi 0, %s343
      %s365 = sphi 0, %s367
      %s368 = sphi 0, %s365
      %s369 = sphi 0, %s368
      %s385 = sphi 0, %s369
      %s389 = sphi 0, %s389
      %s391 = sphi 0, %s389
      %s392 = sphi 0, %s391
      %s406 = sphi 0, %s392
      %s410 = sphi 0, %s410
      %s412 = sphi 0, %s410
      %s413 = sphi 0, %s412
      %s427 = sphi 0, %s413
      %s431 = sphi 0, %s431
      %s433 = sphi 0, %s431
      %s434 = sphi 0, %s433
      %s448 = sphi 0, %s434
      %s452 = sphi 0, %s452
      %s454 = sphi 0, %s452
      %s455 = sphi 0, %s454
      %s469 = sphi 0, %s455
      %s473 = sphi 0, %s473
      %s475 = sphi 0, %s473
      %s476 = sphi 0, %s475
      %s490 = sphi 0, %s476
      %s494 = sphi 0, %s494
      %s496 = sphi 0, %s494
      %s497 = sphi 0, %s496
      %s511 = sphi 0, %s497
      %s515 = sphi 0, %s515
      %s517 = sphi 0, %s515
      %s518 = sphi 0, %s517
      %s532 = sphi 0, %s518
    $region4: #{bert_forward.1} parent=1 // loop_header_branch
      %30 = sbr.rel (%p28) target = $region8
    $region5: #{bert_forward.1} parent=1 // loop_body
      %s32 = ssub.s32 %s27, 1
      %s33 = ssub.s32 %s27, 2
      %s34 = sadd.s32 %s27, 1
      %s36 = sadd.s32 %s35, 1
      %p39 = scmp.eq.s32.totalorder %s27, 1
      %p40 = scmp.ne.s32.totalorder %s35, %s37
      %p41 = scmp.eq.s32.totalorder %s27, 0
      %p42 = por %p40, %p41
      %p43 = scmp.ne.s32.totalorder %s35, %s37
      %p44 = scmp.eq.s32.totalorder %s32, 1
      %p45 = por %p43, %p44
      %p46 = scmp.ne.s32.totalorder %s37, %s38
      %p47 = scmp.eq.s32.totalorder %s32, 0
      %p48 = por %p46, %p47
      %p49 = scmp.ne.s32.totalorder %s37, %s38
      %p50 = scmp.eq.s32.totalorder %s33, 1
      %p51 = por %p49, %p50
      %p53 = scmp.ne.s32.totalorder %s38, %s52
      %p54 = scmp.eq.s32.totalorder %s33, 0
      %p55 = por %p53, %p54
      %s57 = sadd.s32 %s56, 1
      %p60 = scmp.eq.s32.totalorder %s27, 1
      %p61 = scmp.ne.s32.totalorder %s56, %s58
      %p62 = scmp.eq.s32.totalorder %s27, 0
      %p63 = por %p61, %p62
      %p64 = scmp.ne.s32.totalorder %s56, %s58
      %p65 = scmp.eq.s32.totalorder %s32, 1
      %p66 = por %p64, %p65
      %p67 = scmp.ne.s32.totalorder %s58, %s59
      %p68 = scmp.eq.s32.totalorder %s32, 0
      %p69 = por %p67, %p68
      %p70 = scmp.ne.s32.totalorder %s58, %s59
      %p71 = scmp.eq.s32.totalorder %s33, 1
      %p72 = por %p70, %p71
      %p74 = scmp.ne.s32.totalorder %s59, %s73
      %p75 = scmp.eq.s32.totalorder %s33, 0
      %p76 = por %p74, %p75
      %s77 = ssub.s32 %s27, %s34
      %p78 = scmp.eq.s32.totalorder %s77, 0
      %s80 = sadd.s32 %s79, 1
      %s81 = scalar_select %p78, %s79, %s80
      %p84 = pneg %p78
      %p85 = scmp.eq.s32.totalorder %s27, 1
      %p86 = por %p84, %p85
      %p87 = scmp.ne.s32.totalorder %s79, %s82
      %p88 = scmp.eq.s32.totalorder %s27, 0
      %p89 = por %p87, %p88
      %p90 = scmp.ne.s32.totalorder %s79, %s82
      %p91 = scmp.eq.s32.totalorder %s32, 1
      %p92 = por %p90, %p91
      %p93 = scmp.ne.s32.totalorder %s82, %s83
      %p94 = scmp.eq.s32.totalorder %s32, 0
      %p95 = por %p93, %p94
      %p96 = scmp.ne.s32.totalorder %s82, %s83
      %p97 = scmp.eq.s32.totalorder %s33, 1
      %p98 = por %p96, %p97
      %p100 = scmp.ne.s32.totalorder %s83, %s99
      %p101 = scmp.eq.s32.totalorder %s33, 0
      %p102 = por %p100, %p101
      %s103 = ssub.s32 %s27, %s34
      %p104 = scmp.eq.s32.totalorder %s103, 0
      %s106 = sadd.s32 %s105, 1
      %s107 = scalar_select %p104, %s105, %s106
      %p110 = pneg %p104
      %p111 = scmp.eq.s32.totalorder %s27, 1
      %p112 = por %p110, %p111
      %p113 = scmp.ne.s32.totalorder %s105, %s108
      %p114 = scmp.eq.s32.totalorder %s27, 0
      %p115 = por %p113, %p114
      %p116 = scmp.ne.s32.totalorder %s105, %s108
      %p117 = scmp.eq.s32.totalorder %s32, 1
      %p118 = por %p116, %p117
      %p119 = scmp.ne.s32.totalorder %s108, %s109
      %p120 = scmp.eq.s32.totalorder %s32, 0
      %p121 = por %p119, %p120
      %p122 = scmp.ne.s32.totalorder %s108, %s109
      %p123 = scmp.eq.s32.totalorder %s33, 1
      %p124 = por %p122, %p123
      %p126 = scmp.ne.s32.totalorder %s109, %s125
      %p127 = scmp.eq.s32.totalorder %s33, 0
      %p128 = por %p126, %p127
      %s129 = ssub.s32 %s27, %s34
      %p130 = scmp.eq.s32.totalorder %s129, 0
      %s132 = sadd.s32 %s131, 1
      %s133 = scalar_select %p130, %s131, %s132
      %p136 = pneg %p130
      %p137 = scmp.eq.s32.totalorder %s27, 1
      %p138 = por %p136, %p137
      %p139 = scmp.ne.s32.totalorder %s131, %s134
      %p140 = scmp.eq.s32.totalorder %s27, 0
      %p141 = por %p139, %p140
      %p142 = scmp.ne.s32.totalorder %s131, %s134
      %p143 = scmp.eq.s32.totalorder %s32, 1
      %p144 = por %p142, %p143
      %p145 = scmp.ne.s32.totalorder %s134, %s135
      %p146 = scmp.eq.s32.totalorder %s32, 0
      %p147 = por %p145, %p146
      %p148 = scmp.ne.s32.totalorder %s134, %s135
      %p149 = scmp.eq.s32.totalorder %s33, 1
      %p150 = por %p148, %p149
      %p152 = scmp.ne.s32.totalorder %s135, %s151
      %p153 = scmp.eq.s32.totalorder %s33, 0
      %p154 = por %p152, %p153
      %s155 = ssub.s32 %s27, %s34
      %p156 = scmp.eq.s32.totalorder %s155, 0
      %s158 = sadd.s32 %s157, 1
      %s159 = scalar_select %p156, %s157, %s158
      %p162 = pneg %p156
      %p163 = scmp.eq.s32.totalorder %s27, 1
      %p164 = por %p162, %p163
      %p165 = scmp.ne.s32.totalorder %s157, %s160
      %p166 = scmp.eq.s32.totalorder %s27, 0
      %p167 = por %p165, %p166
      %p168 = scmp.ne.s32.totalorder %s157, %s160
      %p169 = scmp.eq.s32.totalorder %s32, 1
      %p170 = por %p168, %p169
      %p171 = scmp.ne.s32.totalorder %s160, %s161
      %p172 = scmp.eq.s32.totalorder %s32, 0
      %p173 = por %p171, %p172
      %p174 = scmp.ne.s32.totalorder %s160, %s161
      %p175 = scmp.eq.s32.totalorder %s33, 1
      %p176 = por %p174, %p175
      %p178 = scmp.ne.s32.totalorder %s161, %s177
      %p179 = scmp.eq.s32.totalorder %s33, 0
      %p180 = por %p178, %p179
      %s181 = ssub.s32 %s27, %s34
      %p182 = scmp.eq.s32.totalorder %s181, 0
      %s184 = sadd.s32 %s183, 1
      %s185 = scalar_select %p182, %s183, %s184
      %p188 = pneg %p182
      %p189 = scmp.eq.s32.totalorder %s27, 1
      %p190 = por %p188, %p189
      %p191 = scmp.ne.s32.totalorder %s183, %s186
      %p192 = scmp.eq.s32.totalorder %s27, 0
      %p193 = por %p191, %p192
      %p194 = scmp.ne.s32.totalorder %s183, %s186
      %p195 = scmp.eq.s32.totalorder %s32, 1
      %p196 = por %p194, %p195
      %p197 = scmp.ne.s32.totalorder %s186, %s187
      %p198 = scmp.eq.s32.totalorder %s32, 0
      %p199 = por %p197, %p198
      %p200 = scmp.ne.s32.totalorder %s186, %s187
      %p201 = scmp.eq.s32.totalorder %s33, 1
      %p202 = por %p200, %p201
      %p204 = scmp.ne.s32.totalorder %s187, %s203
      %p205 = scmp.eq.s32.totalorder %s33, 0
      %p206 = por %p204, %p205
      %s207 = ssub.s32 %s27, %s34
      %p208 = scmp.eq.s32.totalorder %s207, 0
      %s210 = sadd.s32 %s209, 1
      %s211 = scalar_select %p208, %s209, %s210
      %p214 = pneg %p208
      %p215 = scmp.eq.s32.totalorder %s27, 1
      %p216 = por %p214, %p215
      %p217 = scmp.ne.s32.totalorder %s209, %s212
      %p218 = scmp.eq.s32.totalorder %s27, 0
      %p219 = por %p217, %p218
      %p220 = scmp.ne.s32.totalorder %s209, %s212
      %p221 = scmp.eq.s32.totalorder %s32, 1
      %p222 = por %p220, %p221
      %p223 = scmp.ne.s32.totalorder %s212, %s213
      %p224 = scmp.eq.s32.totalorder %s32, 0
      %p225 = por %p223, %p224
      %p226 = scmp.ne.s32.totalorder %s212, %s213
      %p227 = scmp.eq.s32.totalorder %s33, 1
      %p228 = por %p226, %p227
      %p230 = scmp.ne.s32.totalorder %s213, %s229
      %p231 = scmp.eq.s32.totalorder %s33, 0
      %p232 = por %p230, %p231
      %s233 = ssub.s32 %s27, %s34
      %p234 = scmp.eq.s32.totalorder %s233, 0
      %s236 = sadd.s32 %s235, 1
      %s237 = scalar_select %p234, %s235, %s236
      %p240 = pneg %p234
      %p241 = scmp.eq.s32.totalorder %s27, 1
      %p242 = por %p240, %p241
      %p243 = scmp.ne.s32.totalorder %s235, %s238
      %p244 = scmp.eq.s32.totalorder %s27, 0
      %p245 = por %p243, %p244
      %p246 = scmp.ne.s32.totalorder %s235, %s238
      %p247 = scmp.eq.s32.totalorder %s32, 1
      %p248 = por %p246, %p247
      %p249 = scmp.ne.s32.totalorder %s238, %s239
      %p250 = scmp.eq.s32.totalorder %s32, 0
      %p251 = por %p249, %p250
      %p252 = scmp.ne.s32.totalorder %s238, %s239
      %p253 = scmp.eq.s32.totalorder %s33, 1
      %p254 = por %p252, %p253
      %p256 = scmp.ne.s32.totalorder %s239, %s255
      %p257 = scmp.eq.s32.totalorder %s33, 0
      %p258 = por %p256, %p257
      %s259 = ssub.s32 %s27, %s34
      %p260 = scmp.eq.s32.totalorder %s259, 0
      %s262 = sadd.s32 %s261, 1
      %s263 = scalar_select %p260, %s261, %s262
      %p266 = pneg %p260
      %p267 = scmp.eq.s32.totalorder %s27, 1
      %p268 = por %p266, %p267
      %p269 = scmp.ne.s32.totalorder %s261, %s264
      %p270 = scmp.eq.s32.totalorder %s27, 0
      %p271 = por %p269, %p270
      %p272 = scmp.ne.s32.totalorder %s261, %s264
      %p273 = scmp.eq.s32.totalorder %s32, 1
      %p274 = por %p272, %p273
      %p275 = scmp.ne.s32.totalorder %s264, %s265
      %p276 = scmp.eq.s32.totalorder %s32, 0
      %p277 = por %p275, %p276
      %p278 = scmp.ne.s32.totalorder %s264, %s265
      %p279 = scmp.eq.s32.totalorder %s33, 1
      %p280 = por %p278, %p279
      %p282 = scmp.ne.s32.totalorder %s265, %s281
      %p283 = scmp.eq.s32.totalorder %s33, 0
      %p284 = por %p282, %p283
      %s285 = ssub.s32 %s27, %s34
      %p286 = scmp.eq.s32.totalorder %s285, 0
      %s288 = sadd.s32 %s287, 1
      %s289 = scalar_select %p286, %s287, %s288
      %p292 = pneg %p286
      %p293 = scmp.eq.s32.totalorder %s27, 1
      %p294 = por %p292, %p293
      %p295 = scmp.ne.s32.totalorder %s287, %s290
      %p296 = scmp.eq.s32.totalorder %s27, 0
      %p297 = por %p295, %p296
      %p298 = scmp.ne.s32.totalorder %s287, %s290
      %p299 = scmp.eq.s32.totalorder %s32, 1
      %p300 = por %p298, %p299
      %p301 = scmp.ne.s32.totalorder %s290, %s291
      %p302 = scmp.eq.s32.totalorder %s32, 0
      %p303 = por %p301, %p302
      %p304 = scmp.ne.s32.totalorder %s290, %s291
      %p305 = scmp.eq.s32.totalorder %s33, 1
      %p306 = por %p304, %p305
      %p308 = scmp.ne.s32.totalorder %s291, %s307
      %p309 = scmp.eq.s32.totalorder %s33, 0
      %p310 = por %p308, %p309
      %s311 = ssub.s32 %s27, %s34
      %p312 = scmp.eq.s32.totalorder %s311, 0
      %s314 = sadd.s32 %s313, 1
      %s315 = scalar_select %p312, %s313, %s314
      %p318 = pneg %p312
      %p319 = scmp.eq.s32.totalorder %s27, 1
      %p320 = por %p318, %p319
      %p321 = scmp.ne.s32.totalorder %s313, %s316
      %p322 = scmp.eq.s32.totalorder %s27, 0
      %p323 = por %p321, %p322
      %p324 = scmp.ne.s32.totalorder %s313, %s316
      %p325 = scmp.eq.s32.totalorder %s32, 1
      %p326 = por %p324, %p325
      %p327 = scmp.ne.s32.totalorder %s316, %s317
      %p328 = scmp.eq.s32.totalorder %s32, 0
      %p329 = por %p327, %p328
      %p330 = scmp.ne.s32.totalorder %s316, %s317
      %p331 = scmp.eq.s32.totalorder %s33, 1
      %p332 = por %p330, %p331
      %p334 = scmp.ne.s32.totalorder %s317, %s333
      %p335 = scmp.eq.s32.totalorder %s33, 0
      %p336 = por %p334, %p335
      %s337 = ssub.s32 %s27, %s34
      %p338 = scmp.eq.s32.totalorder %s337, 0
      %s340 = sadd.s32 %s339, 1
      %s341 = scalar_select %p338, %s339, %s340
      %p344 = pneg %p338
      %p345 = scmp.eq.s32.totalorder %s27, 1
      %p346 = por %p344, %p345
      %p347 = scmp.ne.s32.totalorder %s339, %s342
      %p348 = scmp.eq.s32.totalorder %s27, 0
      %p349 = por %p347, %p348
      %p350 = scmp.ne.s32.totalorder %s339, %s342
      %p351 = scmp.eq.s32.totalorder %s32, 1
      %p352 = por %p350, %p351
      %p353 = scmp.ne.s32.totalorder %s342, %s343
      %p354 = scmp.eq.s32.totalorder %s32, 0
      %p355 = por %p353, %p354
      %p356 = scmp.ne.s32.totalorder %s342, %s343
      %p357 = scmp.eq.s32.totalorder %s33, 1
      %p358 = por %p356, %p357
      %p360 = scmp.ne.s32.totalorder %s343, %s359
      %p361 = scmp.eq.s32.totalorder %s33, 0
      %p362 = por %p360, %p361
      %s363 = ssub.s32 %s27, %s34
      %p364 = scmp.eq.s32.totalorder %s363, 0
      %s366 = sadd.s32 %s365, 1
      %s367 = scalar_select %p364, %s365, %s366
      %p370 = pneg %p364
      %p371 = scmp.eq.s32.totalorder %s27, 1
      %p372 = por %p370, %p371
      %p373 = scmp.ne.s32.totalorder %s365, %s368
      %p374 = scmp.eq.s32.totalorder %s27, 0
      %p375 = por %p373, %p374
      %p376 = scmp.ne.s32.totalorder %s365, %s368
      %p377 = scmp.eq.s32.totalorder %s32, 1
      %p378 = por %p376, %p377
      %p379 = scmp.ne.s32.totalorder %s368, %s369
      %p380 = scmp.eq.s32.totalorder %s32, 0
      %p381 = por %p379, %p380
      %p382 = scmp.ne.s32.totalorder %s368, %s369
      %p383 = scmp.eq.s32.totalorder %s33, 1
      %p384 = por %p382, %p383
      %p386 = scmp.ne.s32.totalorder %s369, %s385
      %p387 = scmp.eq.s32.totalorder %s33, 0
      %p388 = por %p386, %p387
      %s390 = sadd.s32 %s389, 1
      %p393 = scmp.eq.s32.totalorder %s27, 1
      %p394 = scmp.ne.s32.totalorder %s389, %s391
      %p395 = scmp.eq.s32.totalorder %s27, 0
      %p396 = por %p394, %p395
      %p397 = scmp.ne.s32.totalorder %s389, %s391
      %p398 = scmp.eq.s32.totalorder %s32, 1
      %p399 = por %p397, %p398
      %p400 = scmp.ne.s32.totalorder %s391, %s392
      %p401 = scmp.eq.s32.totalorder %s32, 0
      %p402 = por %p400, %p401
      %p403 = scmp.ne.s32.totalorder %s391, %s392
      %p404 = scmp.eq.s32.totalorder %s33, 1
      %p405 = por %p403, %p404
      %p407 = scmp.ne.s32.totalorder %s392, %s406
      %p408 = scmp.eq.s32.totalorder %s33, 0
      %p409 = por %p407, %p408
      %s411 = sadd.s32 %s410, 1
      %p414 = scmp.eq.s32.totalorder %s27, 1
      %p415 = scmp.ne.s32.totalorder %s410, %s412
      %p416 = scmp.eq.s32.totalorder %s27, 0
      %p417 = por %p415, %p416
      %p418 = scmp.ne.s32.totalorder %s410, %s412
      %p419 = scmp.eq.s32.totalorder %s32, 1
      %p420 = por %p418, %p419
      %p421 = scmp.ne.s32.totalorder %s412, %s413
      %p422 = scmp.eq.s32.totalorder %s32, 0
      %p423 = por %p421, %p422
      %p424 = scmp.ne.s32.totalorder %s412, %s413
      %p425 = scmp.eq.s32.totalorder %s33, 1
      %p426 = por %p424, %p425
      %p428 = scmp.ne.s32.totalorder %s413, %s427
      %p429 = scmp.eq.s32.totalorder %s33, 0
      %p430 = por %p428, %p429
      %s432 = sadd.s32 %s431, 1
      %p435 = scmp.eq.s32.totalorder %s27, 1
      %p436 = scmp.ne.s32.totalorder %s431, %s433
      %p437 = scmp.eq.s32.totalorder %s27, 0
      %p438 = por %p436, %p437
      %p439 = scmp.ne.s32.totalorder %s431, %s433
      %p440 = scmp.eq.s32.totalorder %s32, 1
      %p441 = por %p439, %p440
      %p442 = scmp.ne.s32.totalorder %s433, %s434
      %p443 = scmp.eq.s32.totalorder %s32, 0
      %p444 = por %p442, %p443
      %p445 = scmp.ne.s32.totalorder %s433, %s434
      %p446 = scmp.eq.s32.totalorder %s33, 1
      %p447 = por %p445, %p446
      %p449 = scmp.ne.s32.totalorder %s434, %s448
      %p450 = scmp.eq.s32.totalorder %s33, 0
      %p451 = por %p449, %p450
      %s453 = sadd.s32 %s452, 1
      %p456 = scmp.eq.s32.totalorder %s27, 1
      %p457 = scmp.ne.s32.totalorder %s452, %s454
      %p458 = scmp.eq.s32.totalorder %s27, 0
      %p459 = por %p457, %p458
      %p460 = scmp.ne.s32.totalorder %s452, %s454
      %p461 = scmp.eq.s32.totalorder %s32, 1
      %p462 = por %p460, %p461
      %p463 = scmp.ne.s32.totalorder %s454, %s455
      %p464 = scmp.eq.s32.totalorder %s32, 0
      %p465 = por %p463, %p464
      %p466 = scmp.ne.s32.totalorder %s454, %s455
      %p467 = scmp.eq.s32.totalorder %s33, 1
      %p468 = por %p466, %p467
      %p470 = scmp.ne.s32.totalorder %s455, %s469
      %p471 = scmp.eq.s32.totalorder %s33, 0
      %p472 = por %p470, %p471
      %s474 = sadd.s32 %s473, 1
      %p477 = scmp.eq.s32.totalorder %s27, 1
      %p478 = scmp.ne.s32.totalorder %s473, %s475
      %p479 = scmp.eq.s32.totalorder %s27, 0
      %p480 = por %p478, %p479
      %p481 = scmp.ne.s32.totalorder %s473, %s475
      %p482 = scmp.eq.s32.totalorder %s32, 1
      %p483 = por %p481, %p482
      %p484 = scmp.ne.s32.totalorder %s475, %s476
      %p485 = scmp.eq.s32.totalorder %s32, 0
      %p486 = por %p484, %p485
      %p487 = scmp.ne.s32.totalorder %s475, %s476
      %p488 = scmp.eq.s32.totalorder %s33, 1
      %p489 = por %p487, %p488
      %p491 = scmp.ne.s32.totalorder %s476, %s490
      %p492 = scmp.eq.s32.totalorder %s33, 0
      %p493 = por %p491, %p492
      %s495 = sadd.s32 %s494, 1
      %p498 = scmp.eq.s32.totalorder %s27, 1
      %p499 = scmp.ne.s32.totalorder %s494, %s496
      %p500 = scmp.eq.s32.totalorder %s27, 0
      %p501 = por %p499, %p500
      %p502 = scmp.ne.s32.totalorder %s494, %s496
      %p503 = scmp.eq.s32.totalorder %s32, 1
      %p504 = por %p502, %p503
      %p505 = scmp.ne.s32.totalorder %s496, %s497
      %p506 = scmp.eq.s32.totalorder %s32, 0
      %p507 = por %p505, %p506
      %p508 = scmp.ne.s32.totalorder %s496, %s497
      %p509 = scmp.eq.s32.totalorder %s33, 1
      %p510 = por %p508, %p509
      %p512 = scmp.ne.s32.totalorder %s497, %s511
      %p513 = scmp.eq.s32.totalorder %s33, 0
      %p514 = por %p512, %p513
      %s516 = sadd.s32 %s515, 1
      %p519 = scmp.eq.s32.totalorder %s27, 1
      %p520 = scmp.ne.s32.totalorder %s515, %s517
      %p521 = scmp.eq.s32.totalorder %s27, 0
      %p522 = por %p520, %p521
      %p523 = scmp.ne.s32.totalorder %s515, %s517
      %p524 = scmp.eq.s32.totalorder %s32, 1
      %p525 = por %p523, %p524
      %p526 = scmp.ne.s32.totalorder %s517, %s518
      %p527 = scmp.eq.s32.totalorder %s32, 0
      %p528 = por %p526, %p527
      %p529 = scmp.ne.s32.totalorder %s517, %s518
      %p530 = scmp.eq.s32.totalorder %s33, 1
      %p531 = por %p529, %p530
      %p533 = scmp.ne.s32.totalorder %s518, %s532
      %p534 = scmp.eq.s32.totalorder %s33, 0
      %p535 = por %p533, %p534
      %p536 = scmp.le.s32.totalorder 1, %s27
      %p537 = scmp.lt.s32.totalorder %s27, 3
      %p538 = pnand %p536, %p537
      %p539 = pneg %p538
      // Predicated region
      $region9: #{bert_forward.1} parent=5 // pred_check
        _
      $region10: #{bert_forward.1} parent=5 // pred_check_branch
        %541 = sbr.rel (%p538) target = $region12
      $region11: #{bert_forward.1} parent=5 // pred_region
        %s542 = ssub.s32 %s27, 1
        // Predicated region
        $region13: #{bert_forward.1} parent=11 // pred_check
          %p543 = pneg %p48
        $region14: #{bert_forward.1} parent=11 // pred_check_branch
          %545 = sbr.rel (%p543) target = $region16
        $region15: #{bert_forward.1} parent=11 // pred_region
          _
        $region16: #{bert_forward.1} parent=11 // pred_fallthru
          _
        // Predicated region
        $region17: #{bert_forward.1} parent=11 // pred_check
          %p546 = pneg %p69
        $region18: #{bert_forward.1} parent=11 // pred_check_branch
          %548 = sbr.rel (%p546) target = $region20
        $region19: #{bert_forward.1} parent=11 // pred_region
          _
        $region20: #{bert_forward.1} parent=11 // pred_fallthru
          _
        // Predicated region
        $region21: #{bert_forward.1} parent=11 // pred_check
          %p549 = pneg %p402
        $region22: #{bert_forward.1} parent=11 // pred_check_branch
          %551 = sbr.rel (%p549) target = $region24
        $region23: #{bert_forward.1} parent=11 // pred_region
          _
        $region24: #{bert_forward.1} parent=11 // pred_fallthru
          _
        // Predicated region
        $region25: #{bert_forward.1} parent=11 // pred_check
          %p552 = pneg %p423
        $region26: #{bert_forward.1} parent=11 // pred_check_branch
          %554 = sbr.rel (%p552) target = $region28
        $region27: #{bert_forward.1} parent=11 // pred_region
          _
        $region28: #{bert_forward.1} parent=11 // pred_fallthru
          _
        // Predicated region
        $region29: #{bert_forward.1} parent=11 // pred_check
          %p555 = pneg %p444
        $region30: #{bert_forward.1} parent=11 // pred_check_branch
          %557 = sbr.rel (%p555) target = $region32
        $region31: #{bert_forward.1} parent=11 // pred_region
          _
        $region32: #{bert_forward.1} parent=11 // pred_fallthru
          _
        // Predicated region
        $region33: #{bert_forward.1} parent=11 // pred_check
          %p558 = pneg %p465
        $region34: #{bert_forward.1} parent=11 // pred_check_branch
          %560 = sbr.rel (%p558) target = $region36
        $region35: #{bert_forward.1} parent=11 // pred_region
          _
        $region36: #{bert_forward.1} parent=11 // pred_fallthru
          _
        // Predicated region
        $region37: #{bert_forward.1} parent=11 // pred_check
          %p561 = pneg %p486
        $region38: #{bert_forward.1} parent=11 // pred_check_branch
          %563 = sbr.rel (%p561) target = $region40
        $region39: #{bert_forward.1} parent=11 // pred_region
          _
        $region40: #{bert_forward.1} parent=11 // pred_fallthru
          _
        // Predicated region
        $region41: #{bert_forward.1} parent=11 // pred_check
          %p564 = pneg %p507
        $region42: #{bert_forward.1} parent=11 // pred_check_branch
          %566 = sbr.rel (%p564) target = $region44
        $region43: #{bert_forward.1} parent=11 // pred_region
          _
        $region44: #{bert_forward.1} parent=11 // pred_fallthru
          _
      $region12: #{bert_forward.1} parent=5 // pred_fallthru
        _
      %p567 = scmp.lt.s32.totalorder %s27, 2
      // Predicated region
      $region45: #{bert_forward.1} parent=5 // pred_check
        %p568 = pneg %p567
      $region46: #{bert_forward.1} parent=5 // pred_check_branch
        %570 = sbr.rel (%p568) target = $region48
      $region47: #{bert_forward.1} parent=5 // pred_region
        // Predicated region
        $region49: #{bert_forward.1} parent=47 // pred_check
          %p571 = pneg %p89
        $region50: #{bert_forward.1} parent=47 // pred_check_branch
          %573 = sbr.rel (%p571) target = $region52
        $region51: #{bert_forward.1} parent=47 // pred_region
          %p574 = scmp.lt.s32.totalorder %s27, 1
          %s575 = scalar_select %p574, %s27, 1
          %s576 = smul.addr %s575, 16
          %s577 = smul.addr %s576, 4
          %s578 = scalar_lea.vmem %s2, %s577
        $region52: #{bert_forward.1} parent=47 // pred_fallthru
          _
        // Predicated region
        $region53: #{bert_forward.1} parent=47 // pred_check
          %p579 = pneg %p115
        $region54: #{bert_forward.1} parent=47 // pred_check_branch
          %581 = sbr.rel (%p579) target = $region56
        $region55: #{bert_forward.1} parent=47 // pred_region
          %p582 = scmp.lt.s32.totalorder %s27, 1
          %s583 = scalar_select %p582, %s27, 1
          %s584 = smul.addr %s583, 2
          %s585 = scalar_lea.vmem %s3, %s584
        $region56: #{bert_forward.1} parent=47 // pred_fallthru
          _
        // Predicated region
        $region57: #{bert_forward.1} parent=47 // pred_check
          %p586 = pneg %p141
        $region58: #{bert_forward.1} parent=47 // pred_check_branch
          %588 = sbr.rel (%p586) target = $region60
        $region59: #{bert_forward.1} parent=47 // pred_region
          %p589 = scmp.lt.s32.totalorder %s27, 1
          %s590 = scalar_select %p589, %s27, 1
          %s591 = smul.addr %s590, 8
          %s592 = smul.addr %s591, 4
          %s593 = scalar_lea.vmem %s4, %s592
        $region60: #{bert_forward.1} parent=47 // pred_fallthru
          _
        // Predicated region
        $region61: #{bert_forward.1} parent=47 // pred_check
          %p594 = pneg %p167
        $region62: #{bert_forward.1} parent=47 // pred_check_branch
          %596 = sbr.rel (%p594) target = $region64
        $region63: #{bert_forward.1} parent=47 // pred_region
          %p597 = scmp.lt.s32.totalorder %s27, 1
          %s598 = scalar_select %p597, %s27, 1
          %s599 = scalar_lea.vmem %s5, %s598
        $region64: #{bert_forward.1} parent=47 // pred_fallthru
          _
        // Predicated region
        $region65: #{bert_forward.1} parent=47 // pred_check
          %p600 = pneg %p193
        $region66: #{bert_forward.1} parent=47 // pred_check_branch
          %602 = sbr.rel (%p600) target = $region68
        $region67: #{bert_forward.1} parent=47 // pred_region
          %p603 = scmp.lt.s32.totalorder %s27, 1
          %s604 = scalar_select %p603, %s27, 1
          %s605 = scalar_lea.vmem %s6, %s604
        $region68: #{bert_forward.1} parent=47 // pred_fallthru
          _
        // Predicated region
        $region69: #{bert_forward.1} parent=47 // pred_check
          %p606 = pneg %p219
        $region70: #{bert_forward.1} parent=47 // pred_check_branch
          %608 = sbr.rel (%p606) target = $region72
        $region71: #{bert_forward.1} parent=47 // pred_region
          %p609 = scmp.lt.s32.totalorder %s27, 1
          %s610 = scalar_select %p609, %s27, 1
          %s611 = scalar_lea.vmem %s7, %s610
        $region72: #{bert_forward.1} parent=47 // pred_fallthru
          _
        // Predicated region
        $region73: #{bert_forward.1} parent=47 // pred_check
          %p612 = pneg %p245
        $region74: #{bert_forward.1} parent=47 // pred_check_branch
          %614 = sbr.rel (%p612) target = $region76
        $region75: #{bert_forward.1} parent=47 // pred_region
          %p615 = scmp.lt.s32.totalorder %s27, 1
          %s616 = scalar_select %p615, %s27, 1
          %s617 = smul.addr %s616, 8
          %s618 = smul.addr %s617, 4
          %s619 = scalar_lea.vmem %s8, %s618
        $region76: #{bert_forward.1} parent=47 // pred_fallthru
          _
        // Predicated region
        $region77: #{bert_forward.1} parent=47 // pred_check
          %p620 = pneg %p271
        $region78: #{bert_forward.1} parent=47 // pred_check_branch
          %622 = sbr.rel (%p620) target = $region80
        $region79: #{bert_forward.1} parent=47 // pred_region
          %p623 = scmp.lt.s32.totalorder %s27, 1
          %s624 = scalar_select %p623, %s27, 1
          %s625 = scalar_lea.vmem %s9, %s624
        $region80: #{bert_forward.1} parent=47 // pred_fallthru
          _
        // Predicated region
        $region81: #{bert_forward.1} parent=47 // pred_check
          %p626 = pneg %p297
        $region82: #{bert_forward.1} parent=47 // pred_check_branch
          %628 = sbr.rel (%p626) target = $region84
        $region83: #{bert_forward.1} parent=47 // pred_region
          %p629 = scmp.lt.s32.totalorder %s27, 1
          %s630 = scalar_select %p629, %s27, 1
          %s631 = smul.addr %s630, 16
          %s632 = smul.addr %s631, 4
          %s633 = scalar_lea.vmem %s10, %s632
        $region84: #{bert_forward.1} parent=47 // pred_fallthru
          _
        // Predicated region
        $region85: #{bert_forward.1} parent=47 // pred_check
          %p634 = pneg %p323
        $region86: #{bert_forward.1} parent=47 // pred_check_branch
          %636 = sbr.rel (%p634) target = $region88
        $region87: #{bert_forward.1} parent=47 // pred_region
          %p637 = scmp.lt.s32.totalorder %s27, 1
          %s638 = scalar_select %p637, %s27, 1
          %s639 = scalar_lea.vmem %s11, %s638
        $region88: #{bert_forward.1} parent=47 // pred_fallthru
          _
        // Predicated region
        $region89: #{bert_forward.1} parent=47 // pred_check
          %p640 = pneg %p349
        $region90: #{bert_forward.1} parent=47 // pred_check_branch
          %642 = sbr.rel (%p640) target = $region92
        $region91: #{bert_forward.1} parent=47 // pred_region
          %p643 = scmp.lt.s32.totalorder %s27, 1
          %s644 = scalar_select %p643, %s27, 1
          %s645 = scalar_lea.vmem %s12, %s644
        $region92: #{bert_forward.1} parent=47 // pred_fallthru
          _
        // Predicated region
        $region93: #{bert_forward.1} parent=47 // pred_check
          %p646 = pneg %p375
        $region94: #{bert_forward.1} parent=47 // pred_check_branch
          %648 = sbr.rel (%p646) target = $region96
        $region95: #{bert_forward.1} parent=47 // pred_region
          %p649 = scmp.lt.s32.totalorder %s27, 1
          %s650 = scalar_select %p649, %s27, 1
          %s651 = scalar_lea.vmem %s13, %s650
        $region96: #{bert_forward.1} parent=47 // pred_fallthru
          _
      $region48: #{bert_forward.1} parent=5 // pred_fallthru
        _
      %p652 = scmp.le.s32.totalorder 1, %s27
      %p653 = scmp.lt.s32.totalorder %s27, 3
      %p654 = pnand %p652, %p653
      %p655 = pneg %p654
      // Predicated region
      $region97: #{bert_forward.1} parent=5 // pred_check
        _
      $region98: #{bert_forward.1} parent=5 // pred_check_branch
        %657 = sbr.rel (%p654) target = $region100
      $region99: #{bert_forward.1} parent=5 // pred_region
        %s658 = ssub.s32 %s27, 1
        %p659 = pneg %p48
        %p660 = pneg %p45
        %p661 = pneg %p69
        %p662 = pneg %p66
        %p663 = scmp.lt.s32.totalorder %s32, 1
        %s664 = scalar_select %p663, %s32, 1
        %s665 = smul.addr %s664, 16
        %s666 = smul.addr %s665, 4
        %s667 = scalar_lea.vmem %s2, %s666
        %p668 = pneg %p95
        %p669 = pneg %p92
        %p670 = scmp.lt.s32.totalorder %s32, 1
        %s671 = scalar_select %p670, %s32, 1
        %s672 = smul.addr %s671, 2
        %s673 = scalar_lea.vmem %s3, %s672
        %p674 = pneg %p121
        %p675 = pneg %p118
        %p676 = scmp.lt.s32.totalorder %s32, 1
        %s677 = scalar_select %p676, %s32, 1
        %s678 = smul.addr %s677, 8
        %s679 = smul.addr %s678, 4
        %s680 = scalar_lea.vmem %s4, %s679
        %p681 = pneg %p147
        %p682 = pneg %p144
        %p683 = scmp.lt.s32.totalorder %s32, 1
        %s684 = scalar_select %p683, %s32, 1
        %s685 = scalar_lea.vmem %s5, %s684
        %p686 = pneg %p173
        %p687 = pneg %p170
        %p688 = scmp.lt.s32.totalorder %s32, 1
        %s689 = scalar_select %p688, %s32, 1
        %s690 = scalar_lea.vmem %s6, %s689
        %p691 = pneg %p199
        %p692 = pneg %p196
        %p693 = scmp.lt.s32.totalorder %s32, 1
        %s694 = scalar_select %p693, %s32, 1
        %s695 = scalar_lea.vmem %s7, %s694
        %p696 = pneg %p225
        %p697 = pneg %p222
        %p698 = scmp.lt.s32.totalorder %s32, 1
        %s699 = scalar_select %p698, %s32, 1
        %s700 = smul.addr %s699, 8
        %s701 = smul.addr %s700, 4
        %s702 = scalar_lea.vmem %s8, %s701
        %p703 = pneg %p251
        %p704 = pneg %p248
        %p705 = scmp.lt.s32.totalorder %s32, 1
        %s706 = scalar_select %p705, %s32, 1
        %s707 = scalar_lea.vmem %s9, %s706
        %p708 = pneg %p277
        %p709 = pneg %p274
        %p710 = scmp.lt.s32.totalorder %s32, 1
        %s711 = scalar_select %p710, %s32, 1
        %s712 = smul.addr %s711, 16
        %s713 = smul.addr %s712, 4
        %s714 = scalar_lea.vmem %s10, %s713
        %p715 = pneg %p303
        %p716 = pneg %p300
        %p717 = scmp.lt.s32.totalorder %s32, 1
        %s718 = scalar_select %p717, %s32, 1
        %s719 = scalar_lea.vmem %s11, %s718
        %p720 = pneg %p329
        %p721 = pneg %p326
        %p722 = scmp.lt.s32.totalorder %s32, 1
        %s723 = scalar_select %p722, %s32, 1
        %s724 = scalar_lea.vmem %s12, %s723
        %p725 = pneg %p355
        %p726 = pneg %p352
        %p727 = scmp.lt.s32.totalorder %s32, 1
        %s728 = scalar_select %p727, %s32, 1
        %s729 = scalar_lea.vmem %s13, %s728
        %p730 = pneg %p381
        %p731 = pneg %p378
        %p732 = pneg %p402
        %p733 = pneg %p399
        %p734 = pneg %p423
        %p735 = pneg %p420
        %p736 = pneg %p444
        %p737 = pneg %p441
        %p738 = pneg %p465
        %p739 = pneg %p462
        %p740 = pneg %p486
        %p741 = pneg %p483
        %p742 = pneg %p507
        %p743 = pneg %p504
        %p744 = pneg %p528
        %p745 = pneg %p525
        %p746 = scmp.lt.s32.totalorder %s32, 1
        %s747 = scalar_select %p746, %s32, 1
        %s748 = smul.addr %s747, 16
        %s749 = smul.addr %s748, 4
        %s750 = scalar_lea.vmem %s2, %s749
        %p751 = scmp.lt.s32.totalorder %s32, 1
        %s752 = scalar_select %p751, %s32, 1
        %s753 = smul.addr %s752, 2
        %s754 = scalar_lea.vmem %s3, %s753
        %p755 = scmp.lt.s32.totalorder %s32, 1
        %s756 = scalar_select %p755, %s32, 1
        %s757 = smul.addr %s756, 8
        %s758 = smul.addr %s757, 4
        %s759 = scalar_lea.vmem %s4, %s758
        %p760 = scmp.lt.s32.totalorder %s32, 1
        %s761 = scalar_select %p760, %s32, 1
        %s762 = scalar_lea.vmem %s5, %s761
        %p763 = scmp.lt.s32.totalorder %s32, 1
        %s764 = scalar_select %p763, %s32, 1
        %s765 = scalar_lea.vmem %s6, %s764
        %p766 = scmp.lt.s32.totalorder %s32, 1
        %s767 = scalar_select %p766, %s32, 1
        %s768 = scalar_lea.vmem %s7, %s767
        %p769 = scmp.lt.s32.totalorder %s32, 1
        %s770 = scalar_select %p769, %s32, 1
        %s771 = smul.addr %s770, 8
        %s772 = smul.addr %s771, 4
        %s773 = scalar_lea.vmem %s8, %s772
        %p774 = scmp.lt.s32.totalorder %s32, 1
        %s775 = scalar_select %p774, %s32, 1
        %s776 = scalar_lea.vmem %s9, %s775
        %p777 = scmp.lt.s32.totalorder %s32, 1
        %s778 = scalar_select %p777, %s32, 1
        %s779 = smul.addr %s778, 16
        %s780 = smul.addr %s779, 4
        %s781 = scalar_lea.vmem %s10, %s780
        %p782 = scmp.lt.s32.totalorder %s32, 1
        %s783 = scalar_select %p782, %s32, 1
        %s784 = scalar_lea.vmem %s11, %s783
        %p785 = scmp.lt.s32.totalorder %s32, 1
        %s786 = scalar_select %p785, %s32, 1
        %s787 = scalar_lea.vmem %s12, %s786
        %p788 = scmp.lt.s32.totalorder %s32, 1
        %s789 = scalar_select %p788, %s32, 1
        %s790 = scalar_lea.vmem %s13, %s789
        %p792 = scmp.eq.s32.totalorder %s32, 0
        // Predicated region
        $region101: #{bert_forward.1} parent=99 // pred_check
          %p793 = pneg %p792
        $region102: #{bert_forward.1} parent=99 // pred_check_branch
          %795 = sbr.rel (%p793) target = $region104
        $region103: #{bert_forward.1} parent=99 // pred_region
          %v796 = vld [vmem:[%s0] sm:$0xff]
          %v797 = vld [vmem:[%s0 + $0x8] sm:$0xff]
          %v798 = vld [vmem:[%s14] sm:$0x1]
          %v799 = vld [vmem:[%s15] sm:$0x1]
          %vm800 = vcmask 523264
          %v801 = vsel %vm800, %v796, 0.0
          %802 = vadd.xlane.f32.xlu0 %v801
          %v803 = vpop.xlane.xlu0 %802
          %v804 = vsel %vm800, %v797, 0.0
          %805 = vadd.xlane.f32.xlu0 %v804
          %v806 = vpop.xlane.xlu0 %805
          %v807 = vrcp.pop 64.0
          %v808 = vmul.f32 %v803, %v807
          %v809 = vmul.f32 %v806, %v807
          %v810 = vsub.f32 %v796, %v808
          %v811 = vsub.f32 %v797, %v809
          %v812 = vmul.f32 %v810, %v810
          %v813 = vmul.f32 %v811, %v811
          %v814 = vsel %vm800, %v812, 0.0
          %815 = vadd.xlane.f32.xlu0 %v814
          %v816 = vpop.xlane.xlu0 %815
          %v817 = vsel %vm800, %v813, 0.0
          %818 = vadd.xlane.f32.xlu0 %v817
          %v819 = vpop.xlane.xlu0 %818
          %v820 = vmul.f32 %v816, %v807
          %v821 = vmul.f32 %v819, %v807
          %v822 = vadd.f32 %v820, 1e-12
          %v823 = vadd.f32 %v821, 1e-12
          %v824 = vrsqrt.pop %v822
          %v825 = vrsqrt.pop %v823
          %v826 = vmul.f32 %v810, %v824
          %v827 = vmul.f32 %v811, %v825
          %v829 = vlaneseq
          %v830 = vshrl.u32 %v829, 7
          %v831 = vsub.s32 0, %v830
          %v832 = vrot.slane %v798, %v831
          %v834 = vmul.f32 %v826, %v832
          %v835 = vmul.f32 %v827, %v832
          %v837 = vlaneseq
          %v838 = vshrl.u32 %v837, 7
          %v839 = vsub.s32 0, %v838
          %v840 = vrot.slane %v799, %v839
          %v842 = vadd.f32 %v834, %v840
          %v843 = vadd.f32 %v835, %v840
          %844 = vst.msk [vmem:[#allocation2] sm:$0xff] %vm800, %v842
          %845 = vst.msk [vmem:[#allocation2 + $0x8] sm:$0xff] %vm800, %v843
          %846 = vst [vmem:[#allocation3] sm:$0x3] 0.0
        $region104: #{bert_forward.1} parent=99 // pred_fallthru
          _
        %v847 = vld [vmem:[#allocation2] sm:$0xff]
        %v848 = vld [vmem:[#allocation2 + $0x8] sm:$0xff]
        %v849 = vpack.c.bf16 %v848, %v847
        %v850 = vld [vmem:[%s750] sm:$0xff]
        %v851 = vld [vmem:[%s750 + $0x8] sm:$0xff]
        %v852 = vld [vmem:[%s750 + $0x10] sm:$0xff]
        %v853 = vld [vmem:[%s750 + $0x18] sm:$0xff]
        %v854 = vld [vmem:[%s750 + $0x20] sm:$0xff]
        %v855 = vld [vmem:[%s750 + $0x28] sm:$0xff]
        %v856 = vld [vmem:[%s750 + $0x30] sm:$0xff]
        %v857 = vld [vmem:[%s750 + $0x38] sm:$0xff]
        %v858 = vld [vmem:[%s754] sm:$0x3]
        %v860 = vlaneseq
        %v861 = vshrl.u32 %v860, 7
        %v862 = vsub.s32 0, %v861
        %v863 = vrot.slane %v858, %v862
        %v864 = vlaneseq
        %v865 = vshrl.u32 %v864, 7
        %v866 = vsub.s32 1, %v865
        %v867 = vrot.slane %v858, %v866
        %v878 = vunpack.c.l.b16 %v850
        %v879 = vunpack.c.h.b16 %v850
        %v880 = vunpack.c.l.b16 %v851
        %v881 = vunpack.c.h.b16 %v851
        %v882 = vunpack.c.l.b16 %v852
        %v883 = vunpack.c.h.b16 %v852
        %v884 = vunpack.c.l.b16 %v853
        %v885 = vunpack.c.h.b16 %v853
        %v886 = vunpack.c.l.b16 %v854
        %v887 = vunpack.c.h.b16 %v854
        %v888 = vunpack.c.l.b16 %v855
        %v889 = vunpack.c.h.b16 %v855
        %v890 = vunpack.c.l.b16 %v856
        %v891 = vunpack.c.h.b16 %v856
        %v892 = vunpack.c.l.b16 %v857
        %v893 = vunpack.c.h.b16 %v857
        %v894 = vpack.c.b16 %v880, %v878
        %v895 = vpack.c.b16 %v881, %v879
        %v896 = vpack.c.b16 %v884, %v882
        %v897 = vpack.c.b16 %v885, %v883
        %v898 = vpack.c.b16 %v888, %v886
        %v899 = vpack.c.b16 %v889, %v887
        %v900 = vpack.c.b16 %v892, %v890
        %v901 = vpack.c.b16 %v893, %v891
        %vm910 = vcmask 523264
        %v912 = vsel %vm910, %v849, 0
        %914 = vmatprep.subr.bf16.mxu0 %v895
        %915 = vmatpush1.bf16.msra.mxu0 %v894
        %916 = vmatprep.subr.bf16.mxu0 %v897
        %917 = vmatpush1.bf16.msra.mxu0 %v896
        %918 = vmatprep.subr.bf16.mxu0 %v899
        %919 = vmatpush1.bf16.msra.mxu0 %v898
        %920 = vmatprep.subr.bf16.mxu0 %v901
        %921 = vmatpush1.bf16.msra.mxu0 %v900
        %922 = vmatprep.subr.bf16.mxu0 0
        %923 = vmatpush1.bf16.msra.mxu0 0
        %924 = vmatprep.subr.bf16.mxu0 0
        %925 = vmatpush1.bf16.msra.mxu0 0
        %926 = vmatprep.subr.bf16.mxu0 0
        %927 = vmatpush1.bf16.msra.mxu0 0
        %928 = vmatprep.subr.bf16.mxu0 0
        %929 = vmatpush1.bf16.msra.mxu0 0
        %930 = vmatprep.subr.bf16.mxu0 0
        %931 = vmatpush1.bf16.msra.mxu0 0
        %932 = vmatprep.subr.bf16.mxu0 0
        %933 = vmatpush1.bf16.msra.mxu0 0
        %934 = vmatprep.subr.bf16.mxu0 0
        %935 = vmatpush1.bf16.msra.mxu0 0
        %936 = vmatprep.subr.bf16.mxu0 0
        %937 = vmatpush1.bf16.msra.mxu0 0
        %938 = vmatprep.subr.bf16.mxu0 0
        %939 = vmatpush1.bf16.msra.mxu0 0
        %940 = vmatprep.subr.bf16.mxu0 0
        %941 = vmatpush1.bf16.msra.mxu0 0
        %942 = vmatprep.subr.bf16.mxu0 0
        %943 = vmatpush1.bf16.msra.mxu0 0
        %944 = vmatprep.subr.bf16.mxu0 0
        %945 = vmatpush1.bf16.msra.mxu0 0
        %946 = vmatprep.mubr.bf16.mxu0 0
        %947 = vmatmul.mubr.bf16.gmra.mrb[0].mxu0 %v912
        %v948 = vpop.f32.mrb[0].mxu0
        %v949 = vadd.f32 %v863, %v948
        %v950 = vpop.f32.mrb[0].mxu0
        %v951 = vadd.f32 %v867, %v950
        %v952 = vpop.f32.mrb[0].mxu0
        %v953 = vadd.f32 %v863, %v952
        %v954 = vpop.f32.mrb[0].mxu0
        %v955 = vadd.f32 %v867, %v954
        %956 = vdwg.mxu0
        %v957 = vld [vmem:[%s1] sm:$0xff]
        %v958 = vld [vmem:[%s1 + $0x8] sm:$0xff]
        %v959 = vpack.c.bf16 %v953, %v949
        %v960 = vpack.c.bf16 %v955, %v951
        %962 = vrot.lane.b32.xlu0 %v959, 64
        %v963 = vpop.permute.xlu0 %962
        %vm964 = vcmask 261120
        %v966 = vsel %vm964, %v959, 0
        %v969 = vsel %vm964, %v963, 0
        %971 = vmatprep.subr.bf16.mxu0 0
        %972 = vmatpush1.bf16.xpose.msra.mxu0 %v969
        %973 = vmatprep.subr.bf16.mxu0 0
        %974 = vmatpush1.bf16.xpose.msra.mxu0 0
        %975 = vmatprep.subr.bf16.mxu0 0
        %976 = vmatpush1.bf16.xpose.msra.mxu0 0
        %977 = vmatprep.subr.bf16.mxu0 0
        %978 = vmatpush1.bf16.xpose.msra.mxu0 0
        %979 = vmatprep.subr.bf16.mxu0 0
        %980 = vmatpush1.bf16.xpose.msra.mxu0 0
        %981 = vmatprep.subr.bf16.mxu0 0
        %982 = vmatpush1.bf16.xpose.msra.mxu0 0
        %983 = vmatprep.subr.bf16.mxu0 0
        %984 = vmatpush1.bf16.xpose.msra.mxu0 0
        %985 = vmatprep.subr.bf16.mxu0 0
        %986 = vmatpush1.bf16.xpose.msra.mxu0 0
        %987 = vmatprep.subr.bf16.mxu0 0
        %988 = vmatpush1.bf16.xpose.msra.mxu0 0
        %989 = vmatprep.subr.bf16.mxu0 0
        %990 = vmatpush1.bf16.xpose.msra.mxu0 0
        %991 = vmatprep.subr.bf16.mxu0 0
        %992 = vmatpush1.bf16.xpose.msra.mxu0 0
        %993 = vmatprep.subr.bf16.mxu0 0
        %994 = vmatpush1.bf16.xpose.msra.mxu0 0
        %995 = vmatprep.subr.bf16.mxu0 0
        %996 = vmatpush1.bf16.xpose.msra.mxu0 0
        %997 = vmatprep.subr.bf16.mxu0 0
        %998 = vmatpush1.bf16.xpose.msra.mxu0 0
        %999 = vmatprep.subr.bf16.mxu0 0
        %1000 = vmatpush1.bf16.xpose.msra.mxu0 0
        %1001 = vmatprep.subr.bf16.mxu0 0
        %1002 = vmatpush1.bf16.xpose.msra.mxu0 0
        %1003 = vmatprep.mubr.bf16.mxu0 0
        %1004 = vmatmul.mubr.bf16.gmra.mrb[0].mxu0 %v966
        %v1005 = vpop.f32.mrb[0].mxu0
        %v1006 = vadd.f32 %v957, %v1005
        %v1007 = vpop.f32.mrb[0].mxu0
        %v1008 = vpop.f32.mrb[0].mxu0
        %v1009 = vadd.f32 %v958, %v1008
        %v1010 = vpop.f32.mrb[0].mxu0
        %1011 = vdwg.mxu0
        %vm1012 = vcmask 130048
        %v1013 = vsel %vm1012, %v1006, -inf
        %1014 = vmax.xlane.f32.xlu0 %v1013
        %v1015 = vpop.xlane.xlu0 %1014
        %v1016 = vsel %vm1012, %v1009, -inf
        %1017 = vmax.xlane.f32.xlu0 %v1016
        %v1018 = vpop.xlane.xlu0 %1017
        %v1019 = vsub.f32 %v1006, %v1015
        %v1020 = vsub.f32 %v1009, %v1018
        %v1021 = vmul.f32 %v1019, 1.442695
        %v1022 = vpow.pop %v1021
        %v1023 = vmul.f32 %v1020, 1.442695
        %v1024 = vpow.pop %v1023
        %v1025 = vsel %vm1012, %v1022, 0.0
        %1026 = vadd.xlane.f32.xlu0 %v1025
        %v1027 = vpop.xlane.xlu0 %1026
        %v1028 = vsel %vm1012, %v1024, 0.0
        %1029 = vadd.xlane.f32.xlu0 %v1028
        %v1030 = vpop.xlane.xlu0 %1029
        %v1031 = vrcp.pop %v1027
        %v1032 = vrcp.pop %v1030
        %v1033 = vmul.f32 %v1022, %v1031
        %v1034 = vmul.f32 %v1024, %v1032
        %v1035 = vpack.c.bf16 %v1034, %v1033
        %v1037 = vsel %vm1012, %v1035, 0
        %1039 = vmatprep.subr.bf16.mxu0 0
        %1040 = vmatpush1.bf16.msra.mxu0 %v960
        %1041 = vmatprep.subr.bf16.mxu0 0
        %1042 = vmatpush1.bf16.msra.mxu0 0
        %1043 = vmatprep.subr.bf16.mxu0 0
        %1044 = vmatpush1.bf16.msra.mxu0 0
        %1045 = vmatprep.subr.bf16.mxu0 0
        %1046 = vmatpush1.bf16.msra.mxu0 0
        %1047 = vmatprep.subr.bf16.mxu0 0
        %1048 = vmatpush1.bf16.msra.mxu0 0
        %1049 = vmatprep.subr.bf16.mxu0 0
        %1050 = vmatpush1.bf16.msra.mxu0 0
        %1051 = vmatprep.subr.bf16.mxu0 0
        %1052 = vmatpush1.bf16.msra.mxu0 0
        %1053 = vmatprep.subr.bf16.mxu0 0
        %1054 = vmatpush1.bf16.msra.mxu0 0
        %1055 = vmatprep.subr.bf16.mxu0 0
        %1056 = vmatpush1.bf16.msra.mxu0 0
        %1057 = vmatprep.subr.bf16.mxu0 0
        %1058 = vmatpush1.bf16.msra.mxu0 0
        %1059 = vmatprep.subr.bf16.mxu0 0
        %1060 = vmatpush1.bf16.msra.mxu0 0
        %1061 = vmatprep.subr.bf16.mxu0 0
        %1062 = vmatpush1.bf16.msra.mxu0 0
        %1063 = vmatprep.subr.bf16.mxu0 0
        %1064 = vmatpush1.bf16.msra.mxu0 0
        %1065 = vmatprep.subr.bf16.mxu0 0
        %1066 = vmatpush1.bf16.msra.mxu0 0
        %1067 = vmatprep.subr.bf16.mxu0 0
        %1068 = vmatpush1.bf16.msra.mxu0 0
        %1069 = vmatprep.subr.bf16.mxu0 0
        %1070 = vmatpush1.bf16.msra.mxu0 0
        %1071 = vmatprep.mubr.bf16.mxu0 0
        %1072 = vmatmul.mubr.bf16.gmra.mrb[0].mxu0 %v1037
        %v1073 = vpop.f32.mrb[0].mxu0
        %v1074 = vadd.f32 0.0, %v1073
        %v1075 = vpop.f32.mrb[0].mxu0
        %v1076 = vpop.f32.mrb[0].mxu0
        %v1077 = vadd.f32 0.0, %v1076
        %v1078 = vpop.f32.mrb[0].mxu0
        %1079 = vdwg.mxu0
        %1080 = vrot.lane.b32.xlu0 %v959, 96
        %v1081 = vpop.permute.xlu0 %1080
        %1082 = vrot.lane.b32.xlu0 %v959, 32
        %v1083 = vpop.permute.xlu0 %1082
        %v1085 = vsel %vm964, %v1081, 0
        %v1088 = vsel %vm964, %v1083, 0
        %1090 = vmatprep.subr.bf16.mxu0 0
        %1091 = vmatpush1.bf16.xpose.msra.mxu0 %v1088
        %1092 = vmatprep.subr.bf16.mxu0 0
        %1093 = vmatpush1.bf16.xpose.msra.mxu0 0
        %1094 = vmatprep.subr.bf16.mxu0 0
        %1095 = vmatpush1.bf16.xpose.msra.mxu0 0
        %1096 = vmatprep.subr.bf16.mxu0 0
        %1097 = vmatpush1.bf16.xpose.msra.mxu0 0
        %1098 = vmatprep.subr.bf16.mxu0 0
        %1099 = vmatpush1.bf16.xpose.msra.mxu0 0
        %1100 = vmatprep.subr.bf16.mxu0 0
        %1101 = vmatpush1.bf16.xpose.msra.mxu0 0
        %1102 = vmatprep.subr.bf16.mxu0 0
        %1103 = vmatpush1.bf16.xpose.msra.mxu0 0
        %1104 = vmatprep.subr.bf16.mxu0 0
        %1105 = vmatpush1.bf16.xpose.msra.mxu0 0
        %1106 = vmatprep.subr.bf16.mxu0 0
        %1107 = vmatpush1.bf16.xpose.msra.mxu0 0
        %1108 = vmatprep.subr.bf16.mxu0 0
        %1109 = vmatpush1.bf16.xpose.msra.mxu0 0
        %1110 = vmatprep.subr.bf16.mxu0 0
        %1111 = vmatpush1.bf16.xpose.msra.mxu0 0
        %1112 = vmatprep.subr.bf16.mxu0 0
        %1113 = vmatpush1.bf16.xpose.msra.mxu0 0
        %1114 = vmatprep.subr.bf16.mxu0 0
        %1115 = vmatpush1.bf16.xpose.msra.mxu0 0
        %1116 = vmatprep.subr.bf16.mxu0 0
        %1117 = vmatpush1.bf16.xpose.msra.mxu0 0
        %1118 = vmatprep.subr.bf16.mxu0 0
        %1119 = vmatpush1.bf16.xpose.msra.mxu0 0
        %1120 = vmatprep.subr.bf16.mxu0 0
        %1121 = vmatpush1.bf16.xpose.msra.mxu0 0
        %1122 = vmatprep.mubr.bf16.mxu0 0
        %1123 = vmatmul.mubr.bf16.gmra.mrb[0].mxu0 %v1085
        %v1124 = vpop.f32.mrb[0].mxu0
        %v1125 = vadd.f32 %v957, %v1124
        %v1126 = vpop.f32.mrb[0].mxu0
        %v1127 = vpop.f32.mrb[0].mxu0
        %v1128 = vadd.f32 %v958, %v1127
        %v1129 = vpop.f32.mrb[0].mxu0
        %1130 = vdwg.mxu0
        %v1131 = vsel %vm1012, %v1125, -inf
        %1132 = vmax.xlane.f32.xlu0 %v1131
        %v1133 = vpop.xlane.xlu0 %1132
        %v1134 = vsel %vm1012, %v1128, -inf
        %1135 = vmax.xlane.f32.xlu0 %v1134
        %v1136 = vpop.xlane.xlu0 %1135
        %v1137 = vsub.f32 %v1125, %v1133
        %v1138 = vsub.f32 %v1128, %v1136
        %v1139 = vmul.f32 %v1137, 1.442695
        %v1140 = vpow.pop %v1139
        %v1141 = vmul.f32 %v1138, 1.442695
        %v1142 = vpow.pop %v1141
        %v1143 = vsel %vm1012, %v1140, 0.0
        %1144 = vadd.xlane.f32.xlu0 %v1143
        %v1145 = vpop.xlane.xlu0 %1144
        %v1146 = vsel %vm1012, %v1142, 0.0
        %1147 = vadd.xlane.f32.xlu0 %v1146
        %v1148 = vpop.xlane.xlu0 %1147
        %v1149 = vrcp.pop %v1145
        %v1150 = vrcp.pop %v1148
        %v1151 = vmul.f32 %v1140, %v1149
        %v1152 = vmul.f32 %v1142, %v1150
        %v1153 = vpack.c.bf16 %v1152, %v1151
        %1155 = vrot.lane.b32.xlu0 %v960, 96
        %v1156 = vpop.permute.xlu0 %1155
        %v1159 = vsel %vm1012, %v1153, 0
        %1161 = vmatprep.subr.bf16.mxu0 0
        %1162 = vmatpush1.bf16.msra.mxu0 %v1156
        %1163 = vmatprep.subr.bf16.mxu0 0
        %1164 = vmatpush1.bf16.msra.mxu0 0
        %1165 = vmatprep.subr.bf16.mxu0 0
        %1166 = vmatpush1.bf16.msra.mxu0 0
        %1167 = vmatprep.subr.bf16.mxu0 0
        %1168 = vmatpush1.bf16.msra.mxu0 0
        %1169 = vmatprep.subr.bf16.mxu0 0
        %1170 = vmatpush1.bf16.msra.mxu0 0
        %1171 = vmatprep.subr.bf16.mxu0 0
        %1172 = vmatpush1.bf16.msra.mxu0 0
        %1173 = vmatprep.subr.bf16.mxu0 0
        %1174 = vmatpush1.bf16.msra.mxu0 0
        %1175 = vmatprep.subr.bf16.mxu0 0
        %1176 = vmatpush1.bf16.msra.mxu0 0
        %1177 = vmatprep.subr.bf16.mxu0 0
        %1178 = vmatpush1.bf16.msra.mxu0 0
        %1179 = vmatprep.subr.bf16.mxu0 0
        %1180 = vmatpush1.bf16.msra.mxu0 0
        %1181 = vmatprep.subr.bf16.mxu0 0
        %1182 = vmatpush1.bf16.msra.mxu0 0
        %1183 = vmatprep.subr.bf16.mxu0 0
        %1184 = vmatpush1.bf16.msra.mxu0 0
        %1185 = vmatprep.subr.bf16.mxu0 0
        %1186 = vmatpush1.bf16.msra.mxu0 0
        %1187 = vmatprep.subr.bf16.mxu0 0
        %1188 = vmatpush1.bf16.msra.mxu0 0
        %1189 = vmatprep.subr.bf16.mxu0 0
        %1190 = vmatpush1.bf16.msra.mxu0 0
        %1191 = vmatprep.subr.bf16.mxu0 0
        %1192 = vmatpush1.bf16.msra.mxu0 0
        %1193 = vmatprep.mubr.bf16.mxu0 0
        %1194 = vmatmul.mubr.bf16.gmra.mrb[0].mxu0 %v1159
        %v1195 = vpop.f32.mrb[0].mxu0
        %v1196 = vadd.f32 0.0, %v1195
        %v1197 = vpop.f32.mrb[0].mxu0
        %v1198 = vpop.f32.mrb[0].mxu0
        %v1199 = vadd.f32 0.0, %v1198
        %v1200 = vpop.f32.mrb[0].mxu0
        %1201 = vdwg.mxu0
        %1204 = vrot.lane.b32.xlu0 %v1196, 32
        %v1205 = vpop.permute.xlu0 %1204
        %1206 = vrot.lane.b32.xlu0 %v1199, 32
        %v1207 = vpop.permute.xlu0 %1206
        %v1210 = vsel %vm964, %v1074, %v1205
        %v1211 = vsel %vm964, %v1077, %v1207
        %v1212 = vpack.c.bf16 %v1211, %v1210
        %v1213 = vld [vmem:[%s759] sm:$0xf]
        %v1214 = vld [vmem:[%s759 + $0x4] sm:$0xf]
        %v1215 = vld [vmem:[%s759 + $0x8] sm:$0xf]
        %v1216 = vld [vmem:[%s759 + $0xc] sm:$0xf]
        %v1217 = vld [vmem:[%s759 + $0x10] sm:$0xf]
        %v1218 = vld [vmem:[%s759 + $0x14] sm:$0xf]
        %v1219 = vld [vmem:[%s759 + $0x18] sm:$0xf]
        %v1220 = vld [vmem:[%s759 + $0x1c] sm:$0xf]
        %v1221 = vld [vmem:[%s762] sm:$0x1]
        %v1223 = vlaneseq
        %v1224 = vshrl.u32 %v1223, 7
        %v1225 = vsub.s32 0, %v1224
        %v1226 = vrot.slane %v1221, %v1225
        %v1236 = vunpack.c.l.b16 %v1213
        %v1237 = vunpack.c.l.b16 %v1214
        %v1238 = vunpack.c.l.b16 %v1215
        %v1239 = vunpack.c.l.b16 %v1216
        %v1240 = vunpack.c.l.b16 %v1217
        %v1241 = vunpack.c.l.b16 %v1218
        %v1242 = vunpack.c.l.b16 %v1219
        %v1243 = vunpack.c.l.b16 %v1220
        %v1244 = vpack.c.b16 %v1237, %v1236
        %v1245 = vpack.c.b16 %v1239, %v1238
        %v1246 = vpack.c.b16 %v1241, %v1240
        %v1247 = vpack.c.b16 %v1243, %v1242
        %v1253 = vsel %vm910, %v1212, 0
        %1255 = vmatprep.subr.bf16.mxu0 0
        %1256 = vmatpush1.bf16.msra.mxu0 %v1244
        %1257 = vmatprep.subr.bf16.mxu0 0
        %1258 = vmatpush1.bf16.msra.mxu0 %v1245
        %1259 = vmatprep.subr.bf16.mxu0 0
        %1260 = vmatpush1.bf16.msra.mxu0 %v1246
        %1261 = vmatprep.subr.bf16.mxu0 0
        %1262 = vmatpush1.bf16.msra.mxu0 %v1247
        %1263 = vmatprep.subr.bf16.mxu0 0
        %1264 = vmatpush1.bf16.msra.mxu0 0
        %1265 = vmatprep.subr.bf16.mxu0 0
        %1266 = vmatpush1.bf16.msra.mxu0 0
        %1267 = vmatprep.subr.bf16.mxu0 0
        %1268 = vmatpush1.bf16.msra.mxu0 0
        %1269 = vmatprep.subr.bf16.mxu0 0
        %1270 = vmatpush1.bf16.msra.mxu0 0
        %1271 = vmatprep.subr.bf16.mxu0 0
        %1272 = vmatpush1.bf16.msra.mxu0 0
        %1273 = vmatprep.subr.bf16.mxu0 0
        %1274 = vmatpush1.bf16.msra.mxu0 0
        %1275 = vmatprep.subr.bf16.mxu0 0
        %1276 = vmatpush1.bf16.msra.mxu0 0
        %1277 = vmatprep.subr.bf16.mxu0 0
        %1278 = vmatpush1.bf16.msra.mxu0 0
        %1279 = vmatprep.subr.bf16.mxu0 0
        %1280 = vmatpush1.bf16.msra.mxu0 0
        %1281 = vmatprep.subr.bf16.mxu0 0
        %1282 = vmatpush1.bf16.msra.mxu0 0
        %1283 = vmatprep.subr.bf16.mxu0 0
        %1284 = vmatpush1.bf16.msra.mxu0 0
        %1285 = vmatprep.subr.bf16.mxu0 0
        %1286 = vmatpush1.bf16.msra.mxu0 0
        %1287 = vmatprep.mubr.bf16.mxu0 0
        %1288 = vmatmul.mubr.bf16.gmra.mrb[0].mxu0 %v1253
        %v1289 = vpop.f32.mrb[0].mxu0
        %v1290 = vadd.f32 %v1226, %v1289
        %v1291 = vpop.f32.mrb[0].mxu0
        %v1292 = vpop.f32.mrb[0].mxu0
        %v1293 = vadd.f32 %v1226, %v1292
        %v1294 = vpop.f32.mrb[0].mxu0
        %1295 = vdwg.mxu0
        %v1296 = vadd.f32 %v1290, %v847
        %v1297 = vadd.f32 %v1293, %v848
        %v1298 = vld [vmem:[%s765] sm:$0x1]
        %v1299 = vld [vmem:[%s768] sm:$0x1]
        %v1300 = vsel %vm910, %v1296, 0.0
        %1301 = vadd.xlane.f32.xlu0 %v1300
        %v1302 = vpop.xlane.xlu0 %1301
        %v1303 = vsel %vm910, %v1297, 0.0
        %1304 = vadd.xlane.f32.xlu0 %v1303
        %v1305 = vpop.xlane.xlu0 %1304
        %v1306 = vrcp.pop 64.0
        %v1307 = vmul.f32 %v1302, %v1306
        %v1308 = vmul.f32 %v1305, %v1306
        %v1309 = vsub.f32 %v1296, %v1307
        %v1310 = vsub.f32 %v1297, %v1308
        %v1311 = vmul.f32 %v1309, %v1309
        %v1312 = vmul.f32 %v1310, %v1310
        %v1313 = vsel %vm910, %v1311, 0.0
        %1314 = vadd.xlane.f32.xlu0 %v1313
        %v1315 = vpop.xlane.xlu0 %1314
        %v1316 = vsel %vm910, %v1312, 0.0
        %1317 = vadd.xlane.f32.xlu0 %v1316
        %v1318 = vpop.xlane.xlu0 %1317
        %v1319 = vmul.f32 %v1315, %v1306
        %v1320 = vmul.f32 %v1318, %v1306
        %v1321 = vadd.f32 %v1319, 1e-12
        %v1322 = vadd.f32 %v1320, 1e-12
        %v1323 = vrsqrt.pop %v1321
        %v1324 = vrsqrt.pop %v1322
        %v1325 = vmul.f32 %v1309, %v1323
        %v1326 = vmul.f32 %v1310, %v1324
        %v1328 = vlaneseq
        %v1329 = vshrl.u32 %v1328, 7
        %v1330 = vsub.s32 0, %v1329
        %v1331 = vrot.slane %v1298, %v1330
        %v1333 = vmul.f32 %v1325, %v1331
        %v1334 = vmul.f32 %v1326, %v1331
        %v1336 = vlaneseq
        %v1337 = vshrl.u32 %v1336, 7
        %v1338 = vsub.s32 0, %v1337
        %v1339 = vrot.slane %v1299, %v1338
        %v1341 = vadd.f32 %v1333, %v1339
        %v1342 = vadd.f32 %v1334, %v1339
        %v1343 = vpack.c.bf16 %v1342, %v1341
        %v1344 = vld [vmem:[%s773] sm:$0xf]
        %v1345 = vld [vmem:[%s773 + $0x4] sm:$0xf]
        %v1346 = vld [vmem:[%s773 + $0x8] sm:$0xf]
        %v1347 = vld [vmem:[%s773 + $0xc] sm:$0xf]
        %v1348 = vld [vmem:[%s773 + $0x10] sm:$0xf]
        %v1349 = vld [vmem:[%s773 + $0x14] sm:$0xf]
        %v1350 = vld [vmem:[%s773 + $0x18] sm:$0xf]
        %v1351 = vld [vmem:[%s773 + $0x1c] sm:$0xf]
        %v1352 = vld [vmem:[%s776] sm:$0x1]
        %v1354 = vlaneseq
        %v1355 = vshrl.u32 %v1354, 7
        %v1356 = vsub.s32 0, %v1355
        %v1357 = vrot.slane %v1352, %v1356
        %v1367 = vunpack.c.l.b16 %v1344
        %v1368 = vunpack.c.l.b16 %v1345
        %v1369 = vunpack.c.l.b16 %v1346
        %v1370 = vunpack.c.l.b16 %v1347
        %v1371 = vunpack.c.l.b16 %v1348
        %v1372 = vunpack.c.l.b16 %v1349
        %v1373 = vunpack.c.l.b16 %v1350
        %v1374 = vunpack.c.l.b16 %v1351
        %v1375 = vpack.c.b16 %v1368, %v1367
        %v1376 = vpack.c.b16 %v1370, %v1369
        %v1377 = vpack.c.b16 %v1372, %v1371
        %v1378 = vpack.c.b16 %v1374, %v1373
        %v1384 = vsel %vm910, %v1343, 0
        %1386 = vmatprep.subr.bf16.mxu0 0
        %1387 = vmatpush1.bf16.msra.mxu0 %v1375
        %1388 = vmatprep.subr.bf16.mxu0 0
        %1389 = vmatpush1.bf16.msra.mxu0 %v1376
        %1390 = vmatprep.subr.bf16.mxu0 0
        %1391 = vmatpush1.bf16.msra.mxu0 %v1377
        %1392 = vmatprep.subr.bf16.mxu0 0
        %1393 = vmatpush1.bf16.msra.mxu0 %v1378
        %1394 = vmatprep.subr.bf16.mxu0 0
        %1395 = vmatpush1.bf16.msra.mxu0 0
        %1396 = vmatprep.subr.bf16.mxu0 0
        %1397 = vmatpush1.bf16.msra.mxu0 0
        %1398 = vmatprep.subr.bf16.mxu0 0
        %1399 = vmatpush1.bf16.msra.mxu0 0
        %1400 = vmatprep.subr.bf16.mxu0 0
        %1401 = vmatpush1.bf16.msra.mxu0 0
        %1402 = vmatprep.subr.bf16.mxu0 0
        %1403 = vmatpush1.bf16.msra.mxu0 0
        %1404 = vmatprep.subr.bf16.mxu0 0
        %1405 = vmatpush1.bf16.msra.mxu0 0
        %1406 = vmatprep.subr.bf16.mxu0 0
        %1407 = vmatpush1.bf16.msra.mxu0 0
        %1408 = vmatprep.subr.bf16.mxu0 0
        %1409 = vmatpush1.bf16.msra.mxu0 0
        %1410 = vmatprep.subr.bf16.mxu0 0
        %1411 = vmatpush1.bf16.msra.mxu0 0
        %1412 = vmatprep.subr.bf16.mxu0 0
        %1413 = vmatpush1.bf16.msra.mxu0 0
        %1414 = vmatprep.subr.bf16.mxu0 0
        %1415 = vmatpush1.bf16.msra.mxu0 0
        %1416 = vmatprep.subr.bf16.mxu0 0
        %1417 = vmatpush1.bf16.msra.mxu0 0
        %1418 = vmatprep.mubr.bf16.mxu0 0
        %1419 = vmatmul.mubr.bf16.gmra.mrb[0].mxu0 %v1384
        %v1420 = vpop.f32.mrb[0].mxu0
        %v1421 = vadd.f32 %v1357, %v1420
        %v1422 = vpop.f32.mrb[0].mxu0
        %v1423 = vpop.f32.mrb[0].mxu0
        %v1424 = vadd.f32 %v1357, %v1423
        %v1425 = vpop.f32.mrb[0].mxu0
        %1426 = vdwg.mxu0
        %v1427 = vmul.f32 %v1421, %v1421
        %v1428 = vmul.f32 %v1424, %v1424
        %v1429 = vmul.f32 %v1421, %v1427
        %v1430 = vmul.f32 %v1424, %v1428
        %v1431 = vmul.f32 %v1429, 0.044715
        %v1432 = vmul.f32 %v1430, 0.044715
        %v1433 = vadd.f32 %v1421, %v1431
        %v1434 = vadd.f32 %v1424, %v1432
        %v1435 = vmul.f32 %v1433, 0.7978846
        %v1436 = vmul.f32 %v1434, 0.7978846
        %v1437 = vtanh.pop %v1435
        %v1438 = vtanh.pop %v1436
        %v1439 = vadd.f32 %v1437, 1.0
        %v1440 = vadd.f32 %v1438, 1.0
        %v1441 = vmul.f32 %v1439, 0.5
        %v1442 = vmul.f32 %v1440, 0.5
        %v1443 = vmul.f32 %v1421, %v1441
        %v1444 = vmul.f32 %v1424, %v1442
        %v1445 = vpack.c.bf16 %v1444, %v1443
        %v1446 = vld [vmem:[%s781] sm:$0xf]
        %v1447 = vld [vmem:[%s781 + $0x4] sm:$0xf]
        %v1448 = vld [vmem:[%s781 + $0x8] sm:$0xf]
        %v1449 = vld [vmem:[%s781 + $0xc] sm:$0xf]
        %v1450 = vld [vmem:[%s781 + $0x10] sm:$0xf]
        %v1451 = vld [vmem:[%s781 + $0x14] sm:$0xf]
        %v1452 = vld [vmem:[%s781 + $0x18] sm:$0xf]
        %v1453 = vld [vmem:[%s781 + $0x1c] sm:$0xf]
        %v1454 = vld [vmem:[%s781 + $0x20] sm:$0xf]
        %v1455 = vld [vmem:[%s781 + $0x24] sm:$0xf]
        %v1456 = vld [vmem:[%s781 + $0x28] sm:$0xf]
        %v1457 = vld [vmem:[%s781 + $0x2c] sm:$0xf]
        %v1458 = vld [vmem:[%s781 + $0x30] sm:$0xf]
        %v1459 = vld [vmem:[%s781 + $0x34] sm:$0xf]
        %v1460 = vld [vmem:[%s781 + $0x38] sm:$0xf]
        %v1461 = vld [vmem:[%s781 + $0x3c] sm:$0xf]
        %v1462 = vld [vmem:[%s784] sm:$0x1]
        %v1464 = vlaneseq
        %v1465 = vshrl.u32 %v1464, 7
        %v1466 = vsub.s32 0, %v1465
        %v1467 = vrot.slane %v1462, %v1466
        %v1485 = vunpack.c.l.b16 %v1446
        %v1486 = vunpack.c.l.b16 %v1447
        %v1487 = vunpack.c.l.b16 %v1448
        %v1488 = vunpack.c.l.b16 %v1449
        %v1489 = vunpack.c.l.b16 %v1450
        %v1490 = vunpack.c.l.b16 %v1451
        %v1491 = vunpack.c.l.b16 %v1452
        %v1492 = vunpack.c.l.b16 %v1453
        %v1493 = vunpack.c.l.b16 %v1454
        %v1494 = vunpack.c.l.b16 %v1455
        %v1495 = vunpack.c.l.b16 %v1456
        %v1496 = vunpack.c.l.b16 %v1457
        %v1497 = vunpack.c.l.b16 %v1458
        %v1498 = vunpack.c.l.b16 %v1459
        %v1499 = vunpack.c.l.b16 %v1460
        %v1500 = vunpack.c.l.b16 %v1461
        %v1501 = vpack.c.b16 %v1486, %v1485
        %v1502 = vpack.c.b16 %v1488, %v1487
        %v1503 = vpack.c.b16 %v1490, %v1489
        %v1504 = vpack.c.b16 %v1492, %v1491
        %v1505 = vpack.c.b16 %v1494, %v1493
        %v1506 = vpack.c.b16 %v1496, %v1495
        %v1507 = vpack.c.b16 %v1498, %v1497
        %v1508 = vpack.c.b16 %v1500, %v1499
        %1517 = vmatprep.subr.bf16.mxu0 0
        %1518 = vmatpush1.bf16.msra.mxu0 %v1501
        %1519 = vmatprep.subr.bf16.mxu0 0
        %1520 = vmatpush1.bf16.msra.mxu0 %v1502
        %1521 = vmatprep.subr.bf16.mxu0 0
        %1522 = vmatpush1.bf16.msra.mxu0 %v1503
        %1523 = vmatprep.subr.bf16.mxu0 0
        %1524 = vmatpush1.bf16.msra.mxu0 %v1504
        %1525 = vmatprep.subr.bf16.mxu0 0
        %1526 = vmatpush1.bf16.msra.mxu0 %v1505
        %1527 = vmatprep.subr.bf16.mxu0 0
        %1528 = vmatpush1.bf16.msra.mxu0 %v1506
        %1529 = vmatprep.subr.bf16.mxu0 0
        %1530 = vmatpush1.bf16.msra.mxu0 %v1507
        %1531 = vmatprep.subr.bf16.mxu0 0
        %1532 = vmatpush1.bf16.msra.mxu0 %v1508
        %1533 = vmatprep.subr.bf16.mxu0 0
        %1534 = vmatpush1.bf16.msra.mxu0 0
        %1535 = vmatprep.subr.bf16.mxu0 0
        %1536 = vmatpush1.bf16.msra.mxu0 0
        %1537 = vmatprep.subr.bf16.mxu0 0
        %1538 = vmatpush1.bf16.msra.mxu0 0
        %1539 = vmatprep.subr.bf16.mxu0 0
        %1540 = vmatpush1.bf16.msra.mxu0 0
        %1541 = vmatprep.subr.bf16.mxu0 0
        %1542 = vmatpush1.bf16.msra.mxu0 0
        %1543 = vmatprep.subr.bf16.mxu0 0
        %1544 = vmatpush1.bf16.msra.mxu0 0
        %1545 = vmatprep.subr.bf16.mxu0 0
        %1546 = vmatpush1.bf16.msra.mxu0 0
        %1547 = vmatprep.subr.bf16.mxu0 0
        %1548 = vmatpush1.bf16.msra.mxu0 0
        %1549 = vmatprep.mubr.bf16.mxu0 0
        %1550 = vmatmul.mubr.bf16.gmra.mrb[0].mxu0 %v1445
        %v1551 = vpop.f32.mrb[0].mxu0
        %v1552 = vadd.f32 %v1467, %v1551
        %v1553 = vpop.f32.mrb[0].mxu0
        %v1554 = vpop.f32.mrb[0].mxu0
        %v1555 = vadd.f32 %v1467, %v1554
        %v1556 = vpop.f32.mrb[0].mxu0
        %1557 = vdwg.mxu0
        %v1558 = vadd.f32 %v1552, %v1341
        %v1559 = vadd.f32 %v1555, %v1342
        %v1560 = vld [vmem:[%s787] sm:$0x1]
        %v1561 = vld [vmem:[%s790] sm:$0x1]
        %v1562 = vsel %vm910, %v1558, 0.0
        %1563 = vadd.xlane.f32.xlu0 %v1562
        %v1564 = vpop.xlane.xlu0 %1563
        %v1565 = vsel %vm910, %v1559, 0.0
        %1566 = vadd.xlane.f32.xlu0 %v1565
        %v1567 = vpop.xlane.xlu0 %1566
        %v1568 = vmul.f32 %v1564, %v1306
        %v1569 = vmul.f32 %v1567, %v1306
        %v1570 = vsub.f32 %v1558, %v1568
        %v1571 = vsub.f32 %v1559, %v1569
        %v1572 = vmul.f32 %v1570, %v1570
        %v1573 = vmul.f32 %v1571, %v1571
        %v1574 = vsel %vm910, %v1572, 0.0
        %1575 = vadd.xlane.f32.xlu0 %v1574
        %v1576 = vpop.xlane.xlu0 %1575
        %v1577 = vsel %vm910, %v1573, 0.0
        %1578 = vadd.xlane.f32.xlu0 %v1577
        %v1579 = vpop.xlane.xlu0 %1578
        %v1580 = vmul.f32 %v1576, %v1306
        %v1581 = vmul.f32 %v1579, %v1306
        %v1582 = vadd.f32 %v1580, 1e-12
        %v1583 = vadd.f32 %v1581, 1e-12
        %v1584 = vrsqrt.pop %v1582
        %v1585 = vrsqrt.pop %v1583
        %v1586 = vmul.f32 %v1570, %v1584
        %v1587 = vmul.f32 %v1571, %v1585
        %v1589 = vlaneseq
        %v1590 = vshrl.u32 %v1589, 7
        %v1591 = vsub.s32 0, %v1590
        %v1592 = vrot.slane %v1560, %v1591
        %v1594 = vmul.f32 %v1586, %v1592
        %v1595 = vmul.f32 %v1587, %v1592
        %v1597 = vlaneseq
        %v1598 = vshrl.u32 %v1597, 7
        %v1599 = vsub.s32 0, %v1598
        %v1600 = vrot.slane %v1561, %v1599
        %v1602 = vadd.f32 %v1594, %v1600
        %v1603 = vadd.f32 %v1595, %v1600
        %1604 = vst.msk [vmem:[#allocation2] sm:$0xff] %vm910, %v1602
        %1605 = vst.msk [vmem:[#allocation2 + $0x8] sm:$0xff] %vm910, %v1603
        %p1606 = scmp.eq.s32.totalorder %s32, 1
        // Predicated region
        $region105: #{bert_forward.1} parent=99 // pred_check
          %p1607 = pneg %p1606
        $region106: #{bert_forward.1} parent=99 // pred_check_branch
          %1609 = sbr.rel (%p1607) target = $region108
        $region107: #{bert_forward.1} parent=99 // pred_region
          %v1611 = vrot.slane %v1603, 7
          %vm1613 = vcmask 1040384
          %v1614 = vsel %vm1613, %v1602, %v1611
          %v1615 = vpack.c.bf16 %v1614, %v1614
          %v1616 = vld [vmem:[%s16] sm:$0xf]
          %v1617 = vld [vmem:[%s16 + $0x4] sm:$0xf]
          %v1618 = vld [vmem:[%s16 + $0x8] sm:$0xf]
          %v1619 = vld [vmem:[%s16 + $0xc] sm:$0xf]
          %v1620 = vld [vmem:[%s16 + $0x10] sm:$0xf]
          %v1621 = vld [vmem:[%s16 + $0x14] sm:$0xf]
          %v1622 = vld [vmem:[%s16 + $0x18] sm:$0xf]
          %v1623 = vld [vmem:[%s16 + $0x1c] sm:$0xf]
          %v1624 = vld [vmem:[%s17] sm:$0x1]
          %v1626 = vlaneseq
          %v1627 = vshrl.u32 %v1626, 7
          %v1628 = vsub.s32 0, %v1627
          %v1629 = vrot.slane %v1624, %v1628
          %v1639 = vunpack.c.l.b16 %v1616
          %v1640 = vunpack.c.l.b16 %v1617
          %v1641 = vunpack.c.l.b16 %v1618
          %v1642 = vunpack.c.l.b16 %v1619
          %v1643 = vunpack.c.l.b16 %v1620
          %v1644 = vunpack.c.l.b16 %v1621
          %v1645 = vunpack.c.l.b16 %v1622
          %v1646 = vunpack.c.l.b16 %v1623
          %v1647 = vpack.c.b16 %v1640, %v1639
          %v1648 = vpack.c.b16 %v1642, %v1641
          %v1649 = vpack.c.b16 %v1644, %v1643
          %v1650 = vpack.c.b16 %v1646, %v1645
          %v1656 = vsel %vm910, %v1615, 0
          %1658 = vmatprep.subr.bf16.mxu0 0
          %1659 = vmatpush1.bf16.msra.mxu0 %v1647
          %1660 = vmatprep.subr.bf16.mxu0 0
          %1661 = vmatpush1.bf16.msra.mxu0 %v1648
          %1662 = vmatprep.subr.bf16.mxu0 0
          %1663 = vmatpush1.bf16.msra.mxu0 %v1649
          %1664 = vmatprep.subr.bf16.mxu0 0
          %1665 = vmatpush1.bf16.msra.mxu0 %v1650
          %1666 = vmatprep.subr.bf16.mxu0 0
          %1667 = vmatpush1.bf16.msra.mxu0 0
          %1668 = vmatprep.subr.bf16.mxu0 0
          %1669 = vmatpush1.bf16.msra.mxu0 0
          %1670 = vmatprep.subr.bf16.mxu0 0
          %1671 = vmatpush1.bf16.msra.mxu0 0
          %1672 = vmatprep.subr.bf16.mxu0 0
          %1673 = vmatpush1.bf16.msra.mxu0 0
          %1674 = vmatprep.subr.bf16.mxu0 0
          %1675 = vmatpush1.bf16.msra.mxu0 0
          %1676 = vmatprep.subr.bf16.mxu0 0
          %1677 = vmatpush1.bf16.msra.mxu0 0
          %1678 = vmatprep.subr.bf16.mxu0 0
          %1679 = vmatpush1.bf16.msra.mxu0 0
          %1680 = vmatprep.subr.bf16.mxu0 0
          %1681 = vmatpush1.bf16.msra.mxu0 0
          %1682 = vmatprep.subr.bf16.mxu0 0
          %1683 = vmatpush1.bf16.msra.mxu0 0
          %1684 = vmatprep.subr.bf16.mxu0 0
          %1685 = vmatpush1.bf16.msra.mxu0 0
          %1686 = vmatprep.subr.bf16.mxu0 0
          %1687 = vmatpush1.bf16.msra.mxu0 0
          %1688 = vmatprep.subr.bf16.mxu0 0
          %1689 = vmatpush1.bf16.msra.mxu0 0
          %1690 = vmatprep.mubr.bf16.mxu0 0
          %1691 = vmatmul.mubr.bf16.gmra.mrb[0].mxu0 %v1656
          %v1692 = vpop.f32.mrb[0].mxu0
          %v1693 = vadd.f32 %v1629, %v1692
          %v1694 = vpop.f32.mrb[0].mxu0
          %v1695 = vpop.f32.mrb[0].mxu0
          %v1696 = vpop.f32.mrb[0].mxu0
          %1697 = vdwg.mxu0
          %v1698 = vmax.f32 %v1693, 0.0
          %v1699 = vpack.c.bf16 %v1698, %v1698
          %v1700 = vld [vmem:[%s18] sm:$0xf]
          %v1701 = vld [vmem:[%s18 + $0x4] sm:$0xf]
          %v1702 = vld [vmem:[%s18 + $0x8] sm:$0xf]
          %v1703 = vld [vmem:[%s18 + $0xc] sm:$0xf]
          %v1704 = vld [vmem:[%s18 + $0x10] sm:$0xf]
          %v1705 = vld [vmem:[%s18 + $0x14] sm:$0xf]
          %v1706 = vld [vmem:[%s18 + $0x18] sm:$0xf]
          %v1707 = vld [vmem:[%s18 + $0x1c] sm:$0xf]
          %v1708 = vld [vmem:[%s19] sm:$0x1]
          %v1710 = vlaneseq
          %v1711 = vshrl.u32 %v1710, 7
          %v1712 = vsub.s32 0, %v1711
          %v1713 = vrot.slane %v1708, %v1712
          %v1723 = vunpack.c.l.b16 %v1700
          %v1724 = vunpack.c.l.b16 %v1701
          %v1725 = vunpack.c.l.b16 %v1702
          %v1726 = vunpack.c.l.b16 %v1703
          %v1727 = vunpack.c.l.b16 %v1704
          %v1728 = vunpack.c.l.b16 %v1705
          %v1729 = vunpack.c.l.b16 %v1706
          %v1730 = vunpack.c.l.b16 %v1707
          %v1731 = vpack.c.b16 %v1724, %v1723
          %v1732 = vpack.c.b16 %v1726, %v1725
          %v1733 = vpack.c.b16 %v1728, %v1727
          %v1734 = vpack.c.b16 %v1730, %v1729
          %v1740 = vsel %vm910, %v1699, 0
          %1742 = vmatprep.subr.bf16.mxu0 0
          %1743 = vmatpush1.bf16.msra.mxu0 %v1731
          %1744 = vmatprep.subr.bf16.mxu0 0
          %1745 = vmatpush1.bf16.msra.mxu0 %v1732
          %1746 = vmatprep.subr.bf16.mxu0 0
          %1747 = vmatpush1.bf16.msra.mxu0 %v1733
          %1748 = vmatprep.subr.bf16.mxu0 0
          %1749 = vmatpush1.bf16.msra.mxu0 %v1734
          %1750 = vmatprep.subr.bf16.mxu0 0
          %1751 = vmatpush1.bf16.msra.mxu0 0
          %1752 = vmatprep.subr.bf16.mxu0 0
          %1753 = vmatpush1.bf16.msra.mxu0 0
          %1754 = vmatprep.subr.bf16.mxu0 0
          %1755 = vmatpush1.bf16.msra.mxu0 0
          %1756 = vmatprep.subr.bf16.mxu0 0
          %1757 = vmatpush1.bf16.msra.mxu0 0
          %1758 = vmatprep.subr.bf16.mxu0 0
          %1759 = vmatpush1.bf16.msra.mxu0 0
          %1760 = vmatprep.subr.bf16.mxu0 0
          %1761 = vmatpush1.bf16.msra.mxu0 0
          %1762 = vmatprep.subr.bf16.mxu0 0
          %1763 = vmatpush1.bf16.msra.mxu0 0
          %1764 = vmatprep.subr.bf16.mxu0 0
          %1765 = vmatpush1.bf16.msra.mxu0 0
          %1766 = vmatprep.subr.bf16.mxu0 0
          %1767 = vmatpush1.bf16.msra.mxu0 0
          %1768 = vmatprep.subr.bf16.mxu0 0
          %1769 = vmatpush1.bf16.msra.mxu0 0
          %1770 = vmatprep.subr.bf16.mxu0 0
          %1771 = vmatpush1.bf16.msra.mxu0 0
          %1772 = vmatprep.subr.bf16.mxu0 0
          %1773 = vmatpush1.bf16.msra.mxu0 0
          %1774 = vmatprep.mubr.bf16.mxu0 0
          %1775 = vmatmul.mubr.bf16.gmra.mrb[0].mxu0 %v1740
          %v1776 = vpop.f32.mrb[0].mxu0
          %v1777 = vadd.f32 %v1713, %v1776
          %v1778 = vpop.f32.mrb[0].mxu0
          %v1779 = vpop.f32.mrb[0].mxu0
          %v1780 = vpop.f32.mrb[0].mxu0
          %1781 = vdwg.mxu0
          %1782 = vst [vmem:[#allocation3] sm:$0x3] %v1777
        $region108: #{bert_forward.1} parent=99 // pred_fallthru
          _
        // Predicated region
        $region109: #{bert_forward.1} parent=99 // pred_check
          %p1783 = pneg %p525
        $region110: #{bert_forward.1} parent=99 // pred_check_branch
          %1785 = sbr.rel (%p1783) target = $region112
        $region111: #{bert_forward.1} parent=99 // pred_region
          %s1787 = ssub.s32 32, 32
          %1788 = vsyncadd [#allocation4], %s1787
          %s1790 = sshll.u32 [#allocation3], 4
          %s1791 = int_to_ptr.vmem [resolvable:$true] %s1790
          %1793 = dma.vmem_to_hbm [thread:$0]  %s1791, 32, %s20, [#allocation4]
        $region112: #{bert_forward.1} parent=99 // pred_fallthru
          _
        // Predicated region
        $region113: #{bert_forward.1} parent=99 // pred_check
          %p1794 = pneg %p525
        $region114: #{bert_forward.1} parent=99 // pred_check_branch
          %1796 = sbr.rel (%p1794) target = $region116
        $region115: #{bert_forward.1} parent=99 // pred_region
          %1797 = dma.done [#allocation4], 32
        $region116: #{bert_forward.1} parent=99 // pred_fallthru
          _
      $region100: #{bert_forward.1} parent=5 // pred_fallthru
        _
      %p1798 = scmp.le.s32.totalorder 2, %s27
      // Predicated region
      $region117: #{bert_forward.1} parent=5 // pred_check
        %p1799 = pneg %p1798
      $region118: #{bert_forward.1} parent=5 // pred_check_branch
        %1801 = sbr.rel (%p1799) target = $region120
      $region119: #{bert_forward.1} parent=5 // pred_region
        %s1802 = ssub.s32 %s27, 2
      $region120: #{bert_forward.1} parent=5 // pred_fallthru
        _
    $region6: #{bert_forward.1} parent=1 // loop_footer
      %s31 = sadd.s32 1, %s27
    $region7: #{bert_forward.1} parent=1 // loop_footer_branch
      %26 = sbr.rel target = $region3
    $region8: #{bert_forward.1} parent=1 // loop_exit
      _
    %1803 = vsyncpa [#allocation4], 1
    %s1804 = scalar_lea.sflag [#allocation4], 1
    %1805 = vsyncpa %s1804, 1

</llo_original>
